<compile_context>
chip_gen: v5e
topology: v5e:2x2
jax: 0.10.0
libtpu: 0.0.40
codegen_flags: <defaults>
</compile_context>

<pallas_src>
import math
import functools

import jax
import jax.numpy as jnp
import numpy as np
from jax import lax
from jax.experimental import pallas as pl
from jax.experimental.pallas import tpu as pltpu


def _encoder_layer_kernel(xq_ref, xf_ref, mask_ref,
                          wq_ref, bq_ref, wkv_ref, bkv_ref,
                          wo_ref, bo_ref, w1_ref, b1_ref, w2_ref, b2_ref,
                          gamma_ref, beta_ref, out_ref,
                          *, n_heads, d_k, d_ff, dff_chunk):
    f32 = jnp.float32
    bf16 = jnp.bfloat16
    scale = 1.0 / math.sqrt(d_k)

    xq = xq_ref[0].astype(f32)        # (Sq, d_model)  query rows of this tile
    xf = xf_ref[0]                    # (S,  d_model)  full sequence (keys / values)
    mask = mask_ref[0]                # (Sq, S) bf16, 1 = attend, 0 = masked
    Sq, d_model = xq.shape

    gamma = gamma_ref[...]            # (1, d_model) f32
    beta = beta_ref[...]

    def layer_norm(z):                # nn.LayerNorm: biased variance, eps = 1e-5
        mu = jnp.mean(z, axis=-1, keepdims=True)
        var = jnp.mean((z - mu) ** 2, axis=-1, keepdims=True)
        return (z - mu) * lax.rsqrt(var + 1e-5) * gamma + beta

    # ---- fused, lane-dense Q / KV projections (bf16 MXU inputs, f32 accumulation) ----
    xq_b = xq.astype(bf16)
    xf_b = xf.astype(bf16)
    q_all = (jnp.dot(xq_b, wq_ref[...], preferred_element_type=f32)
             + bq_ref[...]).astype(bf16)                       # (Sq, H*d_k)
    kv_all = (jnp.dot(xf_b, wkv_ref[...], preferred_element_type=f32)
              + bkv_ref[...]).astype(bf16)                     # (S, 2*H*d_k)  [K | V]

    is_masked = mask == 0.0                                    # computed once, reused per head
    hdk = n_heads * d_k

    # ---- per-head attention; output projection accumulated (no concat/relayout) ----
    attn = jnp.zeros((Sq, d_model), f32)
    for h in range(n_heads):                                   # small static unroll
        q_h = q_all[:, h * d_k:(h + 1) * d_k]                  # (Sq, d_k) bf16
        k_h = kv_all[:, h * d_k:(h + 1) * d_k]                 # (S,  d_k) bf16
        v_h = kv_all[:, hdk + h * d_k: hdk + (h + 1) * d_k]    # (S,  d_k) bf16

        s = scale * lax.dot_general(q_h, k_h, (((1,), (1,)), ((), ())),
                                    preferred_element_type=f32)        # (Sq, S) f32
        s = jnp.where(is_masked, -1e9, s)                      # masked_fill semantics
        s = s - jnp.max(s, axis=-1, keepdims=True)
        e = jnp.exp(s)
        w = e * pl.reciprocal(jnp.sum(e, axis=-1, keepdims=True), approx=True)

        head = jnp.dot(w.astype(bf16), v_h, preferred_element_type=f32)  # (Sq, d_k)
        attn = attn + jnp.dot(head.astype(bf16), wo_ref[h * d_k:(h + 1) * d_k, :],
                              preferred_element_type=f32)
    attn = attn + bo_ref[...]

    x1 = layer_norm(xq + attn)        # residual + LayerNorm (dropout = identity)
    x1_b = x1.astype(bf16)

    # ---- feed-forward, tiled over d_ff (bounded live h1, f32 accumulator) ----
    n_chunks = d_ff // dff_chunk

    def ff_body(c, acc):
        lo = pl.multiple_of(c * dff_chunk, dff_chunk)
        h1 = jnp.dot(x1_b, w1_ref[:, pl.ds(lo, dff_chunk)],
                     preferred_element_type=f32)
        h1 = jnp.maximum(h1 + b1_ref[:, pl.ds(lo, dff_chunk)], 0.0)
        return acc + jnp.dot(h1.astype(bf16), w2_ref[pl.ds(lo, dff_chunk), :],
                             preferred_element_type=f32)

    ff = lax.fori_loop(0, n_chunks, ff_body, jnp.zeros((Sq, d_model), f32))
    ff = ff + b2_ref[...]

    out_ref[0] = layer_norm(x1 + ff).astype(out_ref.dtype)     # same gamma/beta reused


# ---------------- parameter packing: fuse per-head linears, cast weights to bf16 ----------------
def pack_layer_params(p):
    H, d_model, d_k = p["wq"].shape
    bf16, f32 = jnp.bfloat16, jnp.float32

    def fuse_w(w):   # (H, d_model, d_k) -> (d_model, H*d_k), head-major columns
        return jnp.transpose(w, (1, 0, 2)).reshape(d_model, H * d_k)

    def fuse_b(b):   # (H, 1, d_k) -> (1, H*d_k)
        return jnp.transpose(b, (1, 0, 2)).reshape(1, H * d_k)

    return {
        "n_heads": H, "d_k": d_k,
        "w_q": fuse_w(p["wq"]).astype(bf16),
        "b_q": fuse_b(p["bq"]).astype(f32),
        "w_kv": jnp.concatenate([fuse_w(p["wk"]), fuse_w(p["wv"])], axis=1).astype(bf16),
        "b_kv": jnp.concatenate([fuse_b(p["bk"]), fuse_b(p["bv"])], axis=1).astype(f32),
        "w_o": p["wo"].astype(bf16),
        "b_o": p["bo"].astype(f32),
        "w1": p["w1"].astype(bf16),
        "b1": p["b1"].astype(f32),
        "w2": p["w2"].astype(bf16),
        "b2": p["b2"].astype(f32),
        "gamma": p["gamma"].astype(f32),
        "beta": p["beta"].astype(f32),
    }


def encoder_layer(x, mask_b, pk):
    B, S, d_model = x.shape
    H, d_k = pk["n_heads"], pk["d_k"]
    d_ff = pk["w1"].shape[1]

    # query-sequence tiling (parallel grid axis); falls back to full S for small/odd S
    S_tile = S
    for cand in (512, 256, 128):
        if S % cand == 0:
            S_tile = cand
            break
    n_t = S // S_tile

    # d_ff chunking for the FFN inner loop (lane-aligned chunk sizes)
    dff_chunk = d_ff
    for cand in (512, 256, 128):
        if d_ff % cand == 0:
            dff_chunk = cand
            break

    kernel = functools.partial(_encoder_layer_kernel, n_heads=H, d_k=d_k,
                               d_ff=d_ff, dff_chunk=dff_chunk)

    param_keys = ["w_q", "b_q", "w_kv", "b_kv", "w_o", "b_o",
                  "w1", "b1", "w2", "b2", "gamma", "beta"]
    params = [pk[k] for k in param_keys]

    in_specs = [
        pl.BlockSpec((1, S_tile, d_model), lambda b, t: (b, t, 0)),  # query rows (this tile)
        pl.BlockSpec((1, S, d_model),      lambda b, t: (b, 0, 0)),  # full sequence for K/V
        pl.BlockSpec((1, S_tile, S),       lambda b, t: (b, t, 0)),  # mask tile (bf16)
    ]
    # all packed params are rank-2, full-block, constant index map
    in_specs += [pl.BlockSpec(p.shape, lambda b, t: (0, 0)) for p in params]

    return pl.pallas_call(
        kernel,
        out_shape=jax.ShapeDtypeStruct((B, S, d_model), x.dtype),
        grid=(B, n_t),
        in_specs=in_specs,
        out_specs=pl.BlockSpec((1, S_tile, d_model), lambda b, t: (b, t, 0)),
        compiler_params=pltpu.CompilerParams(
            dimension_semantics=("parallel", "parallel"),
            vmem_limit_bytes=56 * 1024 * 1024,   # safe on v5e/v6e (128 MiB) and v7x (64 MiB)
        ),
    )(x, x, mask_b, *params)


def encoder_forward(x, mask, layer_params):
    mask_b = mask.astype(jnp.bfloat16)           # halve mask DMA; 0/1 exact in bf16
    for p in layer_params:
        x = encoder_layer(x, mask_b, pack_layer_params(p))
    return x


# ---------------- deterministic parameter init (PyTorch Linear-style uniform) ----------------
def init_encoder_params(key, n_layers, d_model, n_heads, d_k, d_ff):
    def lin(k, fan_in, shape):
        bound = 1.0 / math.sqrt(fan_in)
        return jax.random.uniform(k, shape, jnp.float32, -bound, bound)

    layers = []
    for _ in range(n_layers):
        key, *ks = jax.random.split(key, 13)
        p = {
            "wq": lin(ks[0], d_model, (n_heads, d_model, d_k)),
            "bq": lin(ks[1], d_model, (n_heads, 1, d_k)),
            "wk": lin(ks[2], d_model, (n_heads, d_model, d_k)),
            "bk": lin(ks[3], d_model, (n_heads, 1, d_k)),
            "wv": lin(ks[4], d_model, (n_heads, d_model, d_k)),
            "bv": lin(ks[5], d_model, (n_heads, 1, d_k)),
            "wo": lin(ks[6], n_heads * d_k, (n_heads * d_k, d_model)),
            "bo": lin(ks[7], n_heads * d_k, (1, d_model)),
            "w1": lin(ks[8], d_model, (d_model, d_ff)),
            "b1": lin(ks[9], d_model, (1, d_ff)),
            "w2": lin(ks[10], d_ff, (d_ff, d_model)),
            "b2": lin(ks[11], d_ff, (1, d_model)),
            "gamma": jnp.ones((1, d_model), jnp.float32),
            "beta": jnp.zeros((1, d_model), jnp.float32),
        }
        layers.append(p)
    return layers


# ---------------- pure-JAX f32 reference (matches the PyTorch module) ----------------
def encoder_ref(x, mask, layer_params):
    for p in layer_params:
        H, _, d_k = p["wq"].shape

        def ln(z):
            mu = jnp.mean(z, -1, keepdims=True)
            var = jnp.mean((z - mu) ** 2, -1, keepdims=True)
            return (z - mu) / jnp.sqrt(var + 1e-5) * p["gamma"] + p["beta"]

        heads = []
        for h in range(H):
            q = x @ p["wq"][h] + p["bq"][h]
            k = x @ p["wk"][h] + p["bk"][h]
            v = x @ p["wv"][h] + p["bv"][h]
            s = (q @ jnp.swapaxes(k, 1, 2)) / math.sqrt(d_k)
            s = jnp.where(mask == 0.0, -1e9, s)
            heads.append(jax.nn.softmax(s, axis=-1) @ v)
        attn = jnp.concatenate(heads, axis=-1) @ p["wo"] + p["bo"]
        x1 = ln(x + attn)
        h1 = jnp.maximum(x1 @ p["w1"] + p["b1"], 0.0)
        x = ln(x1 + h1 @ p["w2"] + p["b2"])
    return x


if __name__ == "__main__":
    # Small shapes consistent with the module: Encoder(n_layers, d_model, n_heads, d_k)
    B, S = 2, 8
    n_layers, d_model, n_heads, d_k = 2, 32, 4, 8
    d_ff = 2048  # EncoderLayer default

    key = jax.random.PRNGKey(0)
    kx, km, kp = jax.random.split(key, 3)
    x = jax.random.normal(kx, (B, S, d_model), jnp.float32)
    mask = (jax.random.uniform(km, (B, S, S)) > 0.3).astype(jnp.float32)

    params = init_encoder_params(kp, n_layers, d_model, n_heads, d_k, d_ff)

    out = jax.block_until_ready(encoder_forward(x, mask, params))
    ref = jax.block_until_ready(encoder_ref(x, mask, params))

    # bf16 MXU inputs (f32 accumulation / softmax / LayerNorm) vs f32 reference
    np.testing.assert_allclose(np.asarray(out), np.asarray(ref), rtol=3e-2, atol=3e-2)

    print("KERNEL_OK")
</pallas_src>

<mosaic_0001>
module attributes {stable_mosaic.version = 11 : i64} {
  func.func @_encoder_layer_kernel(%arg0: i32, %arg1: i32, %arg2: memref<1x8x32xf32, #tpu.memory_space<vmem>>, %arg3: memref<1x8x32xf32, #tpu.memory_space<vmem>>, %arg4: memref<1x8x8xbf16, #tpu.memory_space<vmem>>, %arg5: memref<32x32xbf16, #tpu.memory_space<vmem>>, %arg6: memref<1x32xf32, #tpu.memory_space<vmem>>, %arg7: memref<32x64xbf16, #tpu.memory_space<vmem>>, %arg8: memref<1x64xf32, #tpu.memory_space<vmem>>, %arg9: memref<32x32xbf16, #tpu.memory_space<vmem>>, %arg10: memref<1x32xf32, #tpu.memory_space<vmem>>, %arg11: memref<32x2048xbf16, #tpu.memory_space<vmem>>, %arg12: memref<1x2048xf32, #tpu.memory_space<vmem>>, %arg13: memref<2048x32xbf16, #tpu.memory_space<vmem>>, %arg14: memref<1x32xf32, #tpu.memory_space<vmem>>, %arg15: memref<1x32xf32, #tpu.memory_space<vmem>>, %arg16: memref<1x32xf32, #tpu.memory_space<vmem>>, %arg17: memref<1x8x32xf32, #tpu.memory_space<vmem>>) attributes {dimension_semantics = [#tpu.dimension_semantics<parallel>, #tpu.dimension_semantics<parallel>], iteration_bounds = array<i64: 2, 1>, scalar_prefetch = 0 : i64, scratch_operands = 0 : i64, tpu.core_type = #tpu.core_type<tc>, window_params = [{transform_indices = @transform_0, window_bounds = array<i64: 1, 8, 32>}, {transform_indices = @transform_1, window_bounds = array<i64: 1, 8, 32>}, {transform_indices = @transform_2, window_bounds = array<i64: 1, 8, 8>}, {pipeline_mode = #tpu.pipeline_mode<synchronous>, transform_indices = @transform_3, window_bounds = array<i64: 32, 32>}, {pipeline_mode = #tpu.pipeline_mode<synchronous>, transform_indices = @transform_4, window_bounds = array<i64: 1, 32>}, {pipeline_mode = #tpu.pipeline_mode<synchronous>, transform_indices = @transform_5, window_bounds = array<i64: 32, 64>}, {pipeline_mode = #tpu.pipeline_mode<synchronous>, transform_indices = @transform_6, window_bounds = array<i64: 1, 64>}, {pipeline_mode = #tpu.pipeline_mode<synchronous>, transform_indices = @transform_7, window_bounds = array<i64: 32, 32>}, {pipeline_mode = #tpu.pipeline_mode<synchronous>, transform_indices = @transform_8, window_bounds = array<i64: 1, 32>}, {pipeline_mode = #tpu.pipeline_mode<synchronous>, transform_indices = @transform_9, window_bounds = array<i64: 32, 2048>}, {pipeline_mode = #tpu.pipeline_mode<synchronous>, transform_indices = @transform_10, window_bounds = array<i64: 1, 2048>}, {pipeline_mode = #tpu.pipeline_mode<synchronous>, transform_indices = @transform_11, window_bounds = array<i64: 2048, 32>}, {pipeline_mode = #tpu.pipeline_mode<synchronous>, transform_indices = @transform_12, window_bounds = array<i64: 1, 32>}, {pipeline_mode = #tpu.pipeline_mode<synchronous>, transform_indices = @transform_13, window_bounds = array<i64: 1, 32>}, {pipeline_mode = #tpu.pipeline_mode<synchronous>, transform_indices = @transform_14, window_bounds = array<i64: 1, 32>}, {transform_indices = @transform_15, window_bounds = array<i64: 1, 8, 32>}]} {
    %c0 = arith.constant 0 : index
    %c0_0 = arith.constant 0 : index
    %c0_1 = arith.constant 0 : index
    %0 = vector.load %arg2[%c0, %c0_0, %c0_1] : memref<1x8x32xf32, #tpu.memory_space<vmem>>, vector<1x8x32xf32>
    %1 = vector.shape_cast %0 : vector<1x8x32xf32> to vector<8x32xf32>
    %c0_2 = arith.constant 0 : index
    %c0_3 = arith.constant 0 : index
    %c0_4 = arith.constant 0 : index
    %2 = vector.load %arg3[%c0_2, %c0_3, %c0_4] : memref<1x8x32xf32, #tpu.memory_space<vmem>>, vector<1x8x32xf32>
    %3 = vector.shape_cast %2 : vector<1x8x32xf32> to vector<8x32xf32>
    %c0_5 = arith.constant 0 : index
    %c0_6 = arith.constant 0 : index
    %c0_7 = arith.constant 0 : index
    %4 = vector.load %arg4[%c0_5, %c0_6, %c0_7] : memref<1x8x8xbf16, #tpu.memory_space<vmem>>, vector<1x8x8xbf16>
    %5 = vector.shape_cast %4 : vector<1x8x8xbf16> to vector<8x8xbf16>
    %c0_8 = arith.constant 0 : index
    %c0_9 = arith.constant 0 : index
    %6 = vector.load %arg15[%c0_8, %c0_9] : memref<1x32xf32, #tpu.memory_space<vmem>>, vector<1x32xf32>
    %c0_10 = arith.constant 0 : index
    %c0_11 = arith.constant 0 : index
    %7 = vector.load %arg16[%c0_10, %c0_11] : memref<1x32xf32, #tpu.memory_space<vmem>>, vector<1x32xf32>
    %8 = arith.truncf %1 : vector<8x32xf32> to vector<8x32xbf16>
    %9 = arith.truncf %3 : vector<8x32xf32> to vector<8x32xbf16>
    %c0_12 = arith.constant 0 : index
    %c0_13 = arith.constant 0 : index
    %10 = vector.load %arg5[%c0_12, %c0_13] : memref<32x32xbf16, #tpu.memory_space<vmem>>, vector<32x32xbf16>
    %cst = arith.constant dense<0.000000e+00> : vector<8x32xf32>
    %11 = tpu.matmul %8, %10, %cst {dimension_numbers = #tpu.dot_dimension_numbers<[1], [0], [0], [1], [0, 0, 1, 1], [], []>} : vector<8x32xbf16>, vector<32x32xbf16>, vector<8x32xf32> -> vector<8x32xf32>
    %c0_14 = arith.constant 0 : index
    %c0_15 = arith.constant 0 : index
    %12 = vector.load %arg6[%c0_14, %c0_15] : memref<1x32xf32, #tpu.memory_space<vmem>>, vector<1x32xf32>
    %13 = vector.broadcast %12 : vector<1x32xf32> to vector<8x32xf32>
    %14 = arith.addf %11, %13 : vector<8x32xf32>
    %15 = arith.truncf %14 : vector<8x32xf32> to vector<8x32xbf16>
    %c0_16 = arith.constant 0 : index
    %c0_17 = arith.constant 0 : index
    %16 = vector.load %arg7[%c0_16, %c0_17] : memref<32x64xbf16, #tpu.memory_space<vmem>>, vector<32x64xbf16>
    %cst_18 = arith.constant dense<0.000000e+00> : vector<8x64xf32>
    %17 = tpu.matmul %9, %16, %cst_18 {dimension_numbers = #tpu.dot_dimension_numbers<[1], [0], [0], [1], [0, 0, 1, 1], [], []>} : vector<8x32xbf16>, vector<32x64xbf16>, vector<8x64xf32> -> vector<8x64xf32>
    %c0_19 = arith.constant 0 : index
    %c0_20 = arith.constant 0 : index
    %18 = vector.load %arg8[%c0_19, %c0_20] : memref<1x64xf32, #tpu.memory_space<vmem>>, vector<1x64xf32>
    %19 = vector.broadcast %18 : vector<1x64xf32> to vector<8x64xf32>
    %20 = arith.addf %17, %19 : vector<8x64xf32>
    %21 = arith.truncf %20 : vector<8x64xf32> to vector<8x64xbf16>
    %cst_21 = arith.constant 0.000000e+00 : bf16
    %22 = vector.broadcast %cst_21 : bf16 to vector<8x8xbf16>
    %23 = arith.cmpf oeq, %5, %22 : vector<8x8xbf16>
    %cst_22 = arith.constant 0.000000e+00 : f32
    %24 = vector.broadcast %cst_22 : f32 to vector<8x32xf32>
    %25 = vector.extract_strided_slice %15 {offsets = [0, 0], sizes = [8, 8], strides = [1, 1]} : vector<8x32xbf16> to vector<8x8xbf16>
    %26 = vector.extract_strided_slice %21 {offsets = [0, 0], sizes = [8, 8], strides = [1, 1]} : vector<8x64xbf16> to vector<8x8xbf16>
    %27 = vector.extract_strided_slice %21 {offsets = [0, 32], sizes = [8, 8], strides = [1, 1]} : vector<8x64xbf16> to vector<8x8xbf16>
    %cst_23 = arith.constant dense<0.000000e+00> : vector<8x8xf32>
    %28 = tpu.matmul %25, %26, %cst_23 {dimension_numbers = #tpu.dot_dimension_numbers<[1], [1], [0], [0], [0, 0, 1, 0], [], []>} : vector<8x8xbf16>, vector<8x8xbf16>, vector<8x8xf32> -> vector<8x8xf32>
    %cst_24 = arith.constant 0.353553385 : f32
    %29 = vector.broadcast %cst_24 : f32 to vector<8x8xf32>
    %30 = arith.mulf %29, %28 : vector<8x8xf32>
    %cst_25 = arith.constant -1.000000e+09 : f32
    %31 = vector.broadcast %cst_25 : f32 to vector<8x8xf32>
    %32 = arith.select %23, %31, %30 : vector<8x8xi1>, vector<8x8xf32>
    %cst_26 = arith.constant dense<0xFF800000> : vector<8xf32>
    %33 = vector.multi_reduction <maximumf>, %32, %cst_26 [1] : vector<8x8xf32> to vector<8xf32>
    %34 = vector.shape_cast %33 : vector<8xf32> to vector<8x1xf32>
    %35 = vector.broadcast %34 : vector<8x1xf32> to vector<8x8xf32>
    %36 = arith.subf %32, %35 : vector<8x8xf32>
    %37 = math.exp %36 : vector<8x8xf32>
    %cst_27 = arith.constant dense<0.000000e+00> : vector<8xf32>
    %38 = vector.multi_reduction <add>, %37, %cst_27 [1] : vector<8x8xf32> to vector<8xf32>
    %39 = vector.shape_cast %38 : vector<8xf32> to vector<8x1xf32>
    %40 = tpu.reciprocal %39 {approx = true} : vector<8x1xf32> -> vector<8x1xf32>
    %41 = vector.broadcast %40 : vector<8x1xf32> to vector<8x8xf32>
    %42 = arith.mulf %37, %41 : vector<8x8xf32>
    %43 = arith.truncf %42 : vector<8x8xf32> to vector<8x8xbf16>
    %cst_28 = arith.constant dense<0.000000e+00> : vector<8x8xf32>
    %44 = tpu.matmul %43, %27, %cst_28 {dimension_numbers = #tpu.dot_dimension_numbers<[1], [0], [0], [1], [0, 0, 1, 1], [], []>} : vector<8x8xbf16>, vector<8x8xbf16>, vector<8x8xf32> -> vector<8x8xf32>
    %45 = arith.truncf %44 : vector<8x8xf32> to vector<8x8xbf16>
    %c0_29 = arith.constant 0 : index
    %c0_30 = arith.constant 0 : index
    %46 = vector.load %arg9[%c0_29, %c0_30] : memref<32x32xbf16, #tpu.memory_space<vmem>>, vector<8x32xbf16>
    %cst_31 = arith.constant dense<0.000000e+00> : vector<8x32xf32>
    %47 = tpu.matmul %45, %46, %cst_31 {dimension_numbers = #tpu.dot_dimension_numbers<[1], [0], [0], [1], [0, 0, 1, 1], [], []>} : vector<8x8xbf16>, vector<8x32xbf16>, vector<8x32xf32> -> vector<8x32xf32>
    %48 = arith.addf %24, %47 : vector<8x32xf32>
    %49 = vector.extract_strided_slice %15 {offsets = [0, 8], sizes = [8, 8], strides = [1, 1]} : vector<8x32xbf16> to vector<8x8xbf16>
    %50 = vector.extract_strided_slice %21 {offsets = [0, 8], sizes = [8, 8], strides = [1, 1]} : vector<8x64xbf16> to vector<8x8xbf16>
    %51 = vector.extract_strided_slice %21 {offsets = [0, 40], sizes = [8, 8], strides = [1, 1]} : vector<8x64xbf16> to vector<8x8xbf16>
    %cst_32 = arith.constant dense<0.000000e+00> : vector<8x8xf32>
    %52 = tpu.matmul %49, %50, %cst_32 {dimension_numbers = #tpu.dot_dimension_numbers<[1], [1], [0], [0], [0, 0, 1, 0], [], []>} : vector<8x8xbf16>, vector<8x8xbf16>, vector<8x8xf32> -> vector<8x8xf32>
    %cst_33 = arith.constant 0.353553385 : f32
    %53 = vector.broadcast %cst_33 : f32 to vector<8x8xf32>
    %54 = arith.mulf %53, %52 : vector<8x8xf32>
    %cst_34 = arith.constant -1.000000e+09 : f32
    %55 = vector.broadcast %cst_34 : f32 to vector<8x8xf32>
    %56 = arith.select %23, %55, %54 : vector<8x8xi1>, vector<8x8xf32>
    %cst_35 = arith.constant dense<0xFF800000> : vector<8xf32>
    %57 = vector.multi_reduction <maximumf>, %56, %cst_35 [1] : vector<8x8xf32> to vector<8xf32>
    %58 = vector.shape_cast %57 : vector<8xf32> to vector<8x1xf32>
    %59 = vector.broadcast %58 : vector<8x1xf32> to vector<8x8xf32>
    %60 = arith.subf %56, %59 : vector<8x8xf32>
    %61 = math.exp %60 : vector<8x8xf32>
    %cst_36 = arith.constant dense<0.000000e+00> : vector<8xf32>
    %62 = vector.multi_reduction <add>, %61, %cst_36 [1] : vector<8x8xf32> to vector<8xf32>
    %63 = vector.shape_cast %62 : vector<8xf32> to vector<8x1xf32>
    %64 = tpu.reciprocal %63 {approx = true} : vector<8x1xf32> -> vector<8x1xf32>
    %65 = vector.broadcast %64 : vector<8x1xf32> to vector<8x8xf32>
    %66 = arith.mulf %61, %65 : vector<8x8xf32>
    %67 = arith.truncf %66 : vector<8x8xf32> to vector<8x8xbf16>
    %cst_37 = arith.constant dense<0.000000e+00> : vector<8x8xf32>
    %68 = tpu.matmul %67, %51, %cst_37 {dimension_numbers = #tpu.dot_dimension_numbers<[1], [0], [0], [1], [0, 0, 1, 1], [], []>} : vector<8x8xbf16>, vector<8x8xbf16>, vector<8x8xf32> -> vector<8x8xf32>
    %69 = arith.truncf %68 : vector<8x8xf32> to vector<8x8xbf16>
    %c8 = arith.constant 8 : index
    %c0_38 = arith.constant 0 : index
    %70 = vector.load %arg9[%c8, %c0_38] : memref<32x32xbf16, #tpu.memory_space<vmem>>, vector<8x32xbf16>
    %cst_39 = arith.constant dense<0.000000e+00> : vector<8x32xf32>
    %71 = tpu.matmul %69, %70, %cst_39 {dimension_numbers = #tpu.dot_dimension_numbers<[1], [0], [0], [1], [0, 0, 1, 1], [], []>} : vector<8x8xbf16>, vector<8x32xbf16>, vector<8x32xf32> -> vector<8x32xf32>
    %72 = arith.addf %48, %71 : vector<8x32xf32>
    %73 = vector.extract_strided_slice %15 {offsets = [0, 16], sizes = [8, 8], strides = [1, 1]} : vector<8x32xbf16> to vector<8x8xbf16>
    %74 = vector.extract_strided_slice %21 {offsets = [0, 16], sizes = [8, 8], strides = [1, 1]} : vector<8x64xbf16> to vector<8x8xbf16>
    %75 = vector.extract_strided_slice %21 {offsets = [0, 48], sizes = [8, 8], strides = [1, 1]} : vector<8x64xbf16> to vector<8x8xbf16>
    %cst_40 = arith.constant dense<0.000000e+00> : vector<8x8xf32>
    %76 = tpu.matmul %73, %74, %cst_40 {dimension_numbers = #tpu.dot_dimension_numbers<[1], [1], [0], [0], [0, 0, 1, 0], [], []>} : vector<8x8xbf16>, vector<8x8xbf16>, vector<8x8xf32> -> vector<8x8xf32>
    %cst_41 = arith.constant 0.353553385 : f32
    %77 = vector.broadcast %cst_41 : f32 to vector<8x8xf32>
    %78 = arith.mulf %77, %76 : vector<8x8xf32>
    %cst_42 = arith.constant -1.000000e+09 : f32
    %79 = vector.broadcast %cst_42 : f32 to vector<8x8xf32>
    %80 = arith.select %23, %79, %78 : vector<8x8xi1>, vector<8x8xf32>
    %cst_43 = arith.constant dense<0xFF800000> : vector<8xf32>
    %81 = vector.multi_reduction <maximumf>, %80, %cst_43 [1] : vector<8x8xf32> to vector<8xf32>
    %82 = vector.shape_cast %81 : vector<8xf32> to vector<8x1xf32>
    %83 = vector.broadcast %82 : vector<8x1xf32> to vector<8x8xf32>
    %84 = arith.subf %80, %83 : vector<8x8xf32>
    %85 = math.exp %84 : vector<8x8xf32>
    %cst_44 = arith.constant dense<0.000000e+00> : vector<8xf32>
    %86 = vector.multi_reduction <add>, %85, %cst_44 [1] : vector<8x8xf32> to vector<8xf32>
    %87 = vector.shape_cast %86 : vector<8xf32> to vector<8x1xf32>
    %88 = tpu.reciprocal %87 {approx = true} : vector<8x1xf32> -> vector<8x1xf32>
    %89 = vector.broadcast %88 : vector<8x1xf32> to vector<8x8xf32>
    %90 = arith.mulf %85, %89 : vector<8x8xf32>
    %91 = arith.truncf %90 : vector<8x8xf32> to vector<8x8xbf16>
    %cst_45 = arith.constant dense<0.000000e+00> : vector<8x8xf32>
    %92 = tpu.matmul %91, %75, %cst_45 {dimension_numbers = #tpu.dot_dimension_numbers<[1], [0], [0], [1], [0, 0, 1, 1], [], []>} : vector<8x8xbf16>, vector<8x8xbf16>, vector<8x8xf32> -> vector<8x8xf32>
    %93 = arith.truncf %92 : vector<8x8xf32> to vector<8x8xbf16>
    %c16 = arith.constant 16 : index
    %c0_46 = arith.constant 0 : index
    %94 = vector.load %arg9[%c16, %c0_46] : memref<32x32xbf16, #tpu.memory_space<vmem>>, vector<8x32xbf16>
    %cst_47 = arith.constant dense<0.000000e+00> : vector<8x32xf32>
    %95 = tpu.matmul %93, %94, %cst_47 {dimension_numbers = #tpu.dot_dimension_numbers<[1], [0], [0], [1], [0, 0, 1, 1], [], []>} : vector<8x8xbf16>, vector<8x32xbf16>, vector<8x32xf32> -> vector<8x32xf32>
    %96 = arith.addf %72, %95 : vector<8x32xf32>
    %97 = vector.extract_strided_slice %15 {offsets = [0, 24], sizes = [8, 8], strides = [1, 1]} : vector<8x32xbf16> to vector<8x8xbf16>
    %98 = vector.extract_strided_slice %21 {offsets = [0, 24], sizes = [8, 8], strides = [1, 1]} : vector<8x64xbf16> to vector<8x8xbf16>
    %99 = vector.extract_strided_slice %21 {offsets = [0, 56], sizes = [8, 8], strides = [1, 1]} : vector<8x64xbf16> to vector<8x8xbf16>
    %cst_48 = arith.constant dense<0.000000e+00> : vector<8x8xf32>
    %100 = tpu.matmul %97, %98, %cst_48 {dimension_numbers = #tpu.dot_dimension_numbers<[1], [1], [0], [0], [0, 0, 1, 0], [], []>} : vector<8x8xbf16>, vector<8x8xbf16>, vector<8x8xf32> -> vector<8x8xf32>
    %cst_49 = arith.constant 0.353553385 : f32
    %101 = vector.broadcast %cst_49 : f32 to vector<8x8xf32>
    %102 = arith.mulf %101, %100 : vector<8x8xf32>
    %cst_50 = arith.constant -1.000000e+09 : f32
    %103 = vector.broadcast %cst_50 : f32 to vector<8x8xf32>
    %104 = arith.select %23, %103, %102 : vector<8x8xi1>, vector<8x8xf32>
    %cst_51 = arith.constant dense<0xFF800000> : vector<8xf32>
    %105 = vector.multi_reduction <maximumf>, %104, %cst_51 [1] : vector<8x8xf32> to vector<8xf32>
    %106 = vector.shape_cast %105 : vector<8xf32> to vector<8x1xf32>
    %107 = vector.broadcast %106 : vector<8x1xf32> to vector<8x8xf32>
    %108 = arith.subf %104, %107 : vector<8x8xf32>
    %109 = math.exp %108 : vector<8x8xf32>
    %cst_52 = arith.constant dense<0.000000e+00> : vector<8xf32>
    %110 = vector.multi_reduction <add>, %109, %cst_52 [1] : vector<8x8xf32> to vector<8xf32>
    %111 = vector.shape_cast %110 : vector<8xf32> to vector<8x1xf32>
    %112 = tpu.reciprocal %111 {approx = true} : vector<8x1xf32> -> vector<8x1xf32>
    %113 = vector.broadcast %112 : vector<8x1xf32> to vector<8x8xf32>
    %114 = arith.mulf %109, %113 : vector<8x8xf32>
    %115 = arith.truncf %114 : vector<8x8xf32> to vector<8x8xbf16>
    %cst_53 = arith.constant dense<0.000000e+00> : vector<8x8xf32>
    %116 = tpu.matmul %115, %99, %cst_53 {dimension_numbers = #tpu.dot_dimension_numbers<[1], [0], [0], [1], [0, 0, 1, 1], [], []>} : vector<8x8xbf16>, vector<8x8xbf16>, vector<8x8xf32> -> vector<8x8xf32>
    %117 = arith.truncf %116 : vector<8x8xf32> to vector<8x8xbf16>
    %c24 = arith.constant 24 : index
    %c0_54 = arith.constant 0 : index
    %118 = vector.load %arg9[%c24, %c0_54] : memref<32x32xbf16, #tpu.memory_space<vmem>>, vector<8x32xbf16>
    %cst_55 = arith.constant dense<0.000000e+00> : vector<8x32xf32>
    %119 = tpu.matmul %117, %118, %cst_55 {dimension_numbers = #tpu.dot_dimension_numbers<[1], [0], [0], [1], [0, 0, 1, 1], [], []>} : vector<8x8xbf16>, vector<8x32xbf16>, vector<8x32xf32> -> vector<8x32xf32>
    %120 = arith.addf %96, %119 : vector<8x32xf32>
    %c0_56 = arith.constant 0 : index
    %c0_57 = arith.constant 0 : index
    %121 = vector.load %arg10[%c0_56, %c0_57] : memref<1x32xf32, #tpu.memory_space<vmem>>, vector<1x32xf32>
    %122 = vector.broadcast %121 : vector<1x32xf32> to vector<8x32xf32>
    %123 = arith.addf %120, %122 : vector<8x32xf32>
    %124 = arith.addf %1, %123 : vector<8x32xf32>
    %cst_58 = arith.constant dense<0.000000e+00> : vector<8xf32>
    %125 = vector.multi_reduction <add>, %124, %cst_58 [1] : vector<8x32xf32> to vector<8xf32>
    %126 = vector.shape_cast %125 : vector<8xf32> to vector<8x1xf32>
    %cst_59 = arith.constant 3.200000e+01 : f32
    %127 = vector.broadcast %cst_59 : f32 to vector<8x1xf32>
    %128 = arith.divf %126, %127 : vector<8x1xf32>
    %129 = vector.broadcast %128 : vector<8x1xf32> to vector<8x32xf32>
    %130 = arith.subf %124, %129 : vector<8x32xf32>
    %131 = arith.mulf %130, %130 : vector<8x32xf32>
    %cst_60 = arith.constant dense<0.000000e+00> : vector<8xf32>
    %132 = vector.multi_reduction <add>, %131, %cst_60 [1] : vector<8x32xf32> to vector<8xf32>
    %133 = vector.shape_cast %132 : vector<8xf32> to vector<8x1xf32>
    %cst_61 = arith.constant 3.200000e+01 : f32
    %134 = vector.broadcast %cst_61 : f32 to vector<8x1xf32>
    %135 = arith.divf %133, %134 : vector<8x1xf32>
    %136 = vector.broadcast %128 : vector<8x1xf32> to vector<8x32xf32>
    %137 = arith.subf %124, %136 : vector<8x32xf32>
    %cst_62 = arith.constant 9.99999974E-6 : f32
    %138 = vector.broadcast %cst_62 : f32 to vector<8x1xf32>
    %139 = arith.addf %135, %138 : vector<8x1xf32>
    %140 = math.rsqrt %139 : vector<8x1xf32>
    %141 = vector.broadcast %140 : vector<8x1xf32> to vector<8x32xf32>
    %142 = arith.mulf %137, %141 : vector<8x32xf32>
    %143 = vector.broadcast %6 : vector<1x32xf32> to vector<8x32xf32>
    %144 = arith.mulf %142, %143 : vector<8x32xf32>
    %145 = vector.broadcast %7 : vector<1x32xf32> to vector<8x32xf32>
    %146 = arith.addf %144, %145 : vector<8x32xf32>
    %147 = arith.truncf %146 : vector<8x32xf32> to vector<8x32xbf16>
    %cst_63 = arith.constant 0.000000e+00 : f32
    %148 = vector.broadcast %cst_63 : f32 to vector<8x32xf32>
    %c0_i32 = arith.constant 0 : i32
    %c4_i32 = arith.constant 4 : i32
    %149 = arith.addi %c0_i32, %c4_i32 : i32
    %c1_i32 = arith.constant 1 : i32
    %150 = scf.for %arg18 = %c0_i32 to %149 step %c1_i32 iter_args(%arg19 = %148) -> (vector<8x32xf32>)  : i32 {
      %c512_i32 = arith.constant 512 : i32
      %180 = arith.muli %arg18, %c512_i32 : i32
      %181 = tpu.assume_multiple %180, 512 : i32
      %c0_75 = arith.constant 0 : index
      %182 = arith.index_cast %181 : i32 to index
      %183 = vector.load %arg11[%c0_75, %182] : memref<32x2048xbf16, #tpu.memory_space<vmem>>, vector<32x512xbf16>
      %cst_76 = arith.constant dense<0.000000e+00> : vector<8x512xf32>
      %184 = tpu.matmul %147, %183, %cst_76 {dimension_numbers = #tpu.dot_dimension_numbers<[1], [0], [0], [1], [0, 0, 1, 1], [], []>} : vector<8x32xbf16>, vector<32x512xbf16>, vector<8x512xf32> -> vector<8x512xf32>
      %c0_77 = arith.constant 0 : index
      %185 = arith.index_cast %181 : i32 to index
      %186 = vector.load %arg12[%c0_77, %185] : memref<1x2048xf32, #tpu.memory_space<vmem>>, vector<1x512xf32>
      %187 = vector.broadcast %186 : vector<1x512xf32> to vector<8x512xf32>
      %188 = arith.addf %184, %187 : vector<8x512xf32>
      %cst_78 = arith.constant 0.000000e+00 : f32
      %189 = vector.broadcast %cst_78 : f32 to vector<8x512xf32>
      %190 = arith.maximumf %188, %189 : vector<8x512xf32>
      %191 = arith.truncf %190 : vector<8x512xf32> to vector<8x512xbf16>
      %192 = arith.index_cast %181 : i32 to index
      %c0_79 = arith.constant 0 : index
      %193 = vector.load %arg13[%192, %c0_79] : memref<2048x32xbf16, #tpu.memory_space<vmem>>, vector<512x32xbf16>
      %cst_80 = arith.constant dense<0.000000e+00> : vector<8x32xf32>
      %194 = tpu.matmul %191, %193, %cst_80 {dimension_numbers = #tpu.dot_dimension_numbers<[1], [0], [0], [1], [0, 0, 1, 1], [], []>} : vector<8x512xbf16>, vector<512x32xbf16>, vector<8x32xf32> -> vector<8x32xf32>
      %195 = arith.addf %arg19, %194 : vector<8x32xf32>
      scf.yield %195 : vector<8x32xf32>
    }
    %c4_i32_64 = arith.constant 4 : i32
    %c0_65 = arith.constant 0 : index
    %c0_66 = arith.constant 0 : index
    %151 = vector.load %arg14[%c0_65, %c0_66] : memref<1x32xf32, #tpu.memory_space<vmem>>, vector<1x32xf32>
    %152 = vector.broadcast %151 : vector<1x32xf32> to vector<8x32xf32>
    %153 = arith.addf %150, %152 : vector<8x32xf32>
    %154 = arith.addf %146, %153 : vector<8x32xf32>
    %cst_67 = arith.constant dense<0.000000e+00> : vector<8xf32>
    %155 = vector.multi_reduction <add>, %154, %cst_67 [1] : vector<8x32xf32> to vector<8xf32>
    %156 = vector.shape_cast %155 : vector<8xf32> to vector<8x1xf32>
    %cst_68 = arith.constant 3.200000e+01 : f32
    %157 = vector.broadcast %cst_68 : f32 to vector<8x1xf32>
    %158 = arith.divf %156, %157 : vector<8x1xf32>
    %159 = vector.broadcast %158 : vector<8x1xf32> to vector<8x32xf32>
    %160 = arith.subf %154, %159 : vector<8x32xf32>
    %161 = arith.mulf %160, %160 : vector<8x32xf32>
    %cst_69 = arith.constant dense<0.000000e+00> : vector<8xf32>
    %162 = vector.multi_reduction <add>, %161, %cst_69 [1] : vector<8x32xf32> to vector<8xf32>
    %163 = vector.shape_cast %162 : vector<8xf32> to vector<8x1xf32>
    %cst_70 = arith.constant 3.200000e+01 : f32
    %164 = vector.broadcast %cst_70 : f32 to vector<8x1xf32>
    %165 = arith.divf %163, %164 : vector<8x1xf32>
    %166 = vector.broadcast %158 : vector<8x1xf32> to vector<8x32xf32>
    %167 = arith.subf %154, %166 : vector<8x32xf32>
    %cst_71 = arith.constant 9.99999974E-6 : f32
    %168 = vector.broadcast %cst_71 : f32 to vector<8x1xf32>
    %169 = arith.addf %165, %168 : vector<8x1xf32>
    %170 = math.rsqrt %169 : vector<8x1xf32>
    %171 = vector.broadcast %170 : vector<8x1xf32> to vector<8x32xf32>
    %172 = arith.mulf %167, %171 : vector<8x32xf32>
    %173 = vector.broadcast %6 : vector<1x32xf32> to vector<8x32xf32>
    %174 = arith.mulf %172, %173 : vector<8x32xf32>
    %175 = vector.broadcast %7 : vector<1x32xf32> to vector<8x32xf32>
    %176 = arith.addf %174, %175 : vector<8x32xf32>
    %c0_72 = arith.constant 0 : index
    %c0_73 = arith.constant 0 : index
    %c0_74 = arith.constant 0 : index
    %177 = vector.load %arg17[%c0_72, %c0_73, %c0_74] : memref<1x8x32xf32, #tpu.memory_space<vmem>>, vector<1x8x32xf32>
    %178 = vector.shape_cast %177 : vector<1x8x32xf32> to vector<8x32xf32>
    %179 = vector.shape_cast %176 : vector<8x32xf32> to vector<1x8x32xf32>
    tpu.vector_store %arg17[%c0_72, %c0_73, %c0_74], %179 {strides = array<i32>} : memref<1x8x32xf32, #tpu.memory_space<vmem>>, vector<1x8x32xf32>,
    return
  }
  func.func @transform_0(%arg0: i32, %arg1: i32) -> (i32, i32, i32) {
    %c0_i32 = arith.constant 0 : i32
    %c0_i32_0 = arith.constant 0 : i32
    return %arg0, %arg1, %c0_i32 : i32, i32, i32
  }
  func.func @transform_1(%arg0: i32, %arg1: i32) -> (i32, i32, i32) {
    %c0_i32 = arith.constant 0 : i32
    %c0_i32_0 = arith.constant 0 : i32
    %c0_i32_1 = arith.constant 0 : i32
    return %arg0, %c0_i32, %c0_i32_0 : i32, i32, i32
  }
  func.func @transform_2(%arg0: i32, %arg1: i32) -> (i32, i32, i32) {
    %c0_i32 = arith.constant 0 : i32
    %c0_i32_0 = arith.constant 0 : i32
    return %arg0, %arg1, %c0_i32 : i32, i32, i32
  }
  func.func @transform_3(%arg0: i32, %arg1: i32) -> (i32, i32) {
    %c0_i32 = arith.constant 0 : i32
    %c0_i32_0 = arith.constant 0 : i32
    %c0_i32_1 = arith.constant 0 : i32
    return %c0_i32, %c0_i32_0 : i32, i32
  }
  func.func @transform_4(%arg0: i32, %arg1: i32) -> (i32, i32) {
    %c0_i32 = arith.constant 0 : i32
    %c0_i32_0 = arith.constant 0 : i32
    %c0_i32_1 = arith.constant 0 : i32
    return %c0_i32, %c0_i32_0 : i32, i32
  }
  func.func @transform_5(%arg0: i32, %arg1: i32) -> (i32, i32) {
    %c0_i32 = arith.constant 0 : i32
    %c0_i32_0 = arith.constant 0 : i32
    %c0_i32_1 = arith.constant 0 : i32
    return %c0_i32, %c0_i32_0 : i32, i32
  }
  func.func @transform_6(%arg0: i32, %arg1: i32) -> (i32, i32) {
    %c0_i32 = arith.constant 0 : i32
    %c0_i32_0 = arith.constant 0 : i32
    %c0_i32_1 = arith.constant 0 : i32
    return %c0_i32, %c0_i32_0 : i32, i32
  }
  func.func @transform_7(%arg0: i32, %arg1: i32) -> (i32, i32) {
    %c0_i32 = arith.constant 0 : i32
    %c0_i32_0 = arith.constant 0 : i32
    %c0_i32_1 = arith.constant 0 : i32
    return %c0_i32, %c0_i32_0 : i32, i32
  }
  func.func @transform_8(%arg0: i32, %arg1: i32) -> (i32, i32) {
    %c0_i32 = arith.constant 0 : i32
    %c0_i32_0 = arith.constant 0 : i32
    %c0_i32_1 = arith.constant 0 : i32
    return %c0_i32, %c0_i32_0 : i32, i32
  }
  func.func @transform_9(%arg0: i32, %arg1: i32) -> (i32, i32) {
    %c0_i32 = arith.constant 0 : i32
    %c0_i32_0 = arith.constant 0 : i32
    %c0_i32_1 = arith.constant 0 : i32
    return %c0_i32, %c0_i32_0 : i32, i32
  }
  func.func @transform_10(%arg0: i32, %arg1: i32) -> (i32, i32) {
    %c0_i32 = arith.constant 0 : i32
    %c0_i32_0 = arith.constant 0 : i32
    %c0_i32_1 = arith.constant 0 : i32
    return %c0_i32, %c0_i32_0 : i32, i32
  }
  func.func @transform_11(%arg0: i32, %arg1: i32) -> (i32, i32) {
    %c0_i32 = arith.constant 0 : i32
    %c0_i32_0 = arith.constant 0 : i32
    %c0_i32_1 = arith.constant 0 : i32
    return %c0_i32, %c0_i32_0 : i32, i32
  }
  func.func @transform_12(%arg0: i32, %arg1: i32) -> (i32, i32) {
    %c0_i32 = arith.constant 0 : i32
    %c0_i32_0 = arith.constant 0 : i32
    %c0_i32_1 = arith.constant 0 : i32
    return %c0_i32, %c0_i32_0 : i32, i32
  }
  func.func @transform_13(%arg0: i32, %arg1: i32) -> (i32, i32) {
    %c0_i32 = arith.constant 0 : i32
    %c0_i32_0 = arith.constant 0 : i32
    %c0_i32_1 = arith.constant 0 : i32
    return %c0_i32, %c0_i32_0 : i32, i32
  }
  func.func @transform_14(%arg0: i32, %arg1: i32) -> (i32, i32) {
    %c0_i32 = arith.constant 0 : i32
    %c0_i32_0 = arith.constant 0 : i32
    %c0_i32_1 = arith.constant 0 : i32
    return %c0_i32, %c0_i32_0 : i32, i32
  }
  func.func @transform_15(%arg0: i32, %arg1: i32) -> (i32, i32, i32) {
    %c0_i32 = arith.constant 0 : i32
    %c0_i32_0 = arith.constant 0 : i32
    return %arg0, %arg1, %c0_i32 : i32, i32, i32
  }
}

</mosaic_0001>

<llo_original>
// kernel: tpu_custom_call.1
$region0: #{tpu_custom_call.1}
  #allocation0 [shape = 'u32[]', space=smem, size = 0x4, offset = 0x4, fixed_abs, tag = 'smem constant byte address 0x4 - core index']
  #allocation1 [shape = 'u32[72,128]{1,0:T(1,128)}', space=vmem, size = 0x9000, scoped, tag = 'internal scratch']
  %s0 = inlined_call_operand.vmem [shape: f32[2,8,32], index: 0, kind: input, shape index: {}]
  %s1 = inlined_call_operand.vmem [shape: f32[2,8,32], index: 1, kind: input, shape index: {}]
  %s2 = inlined_call_operand.vmem [shape: bf16[2,8,8], index: 2, kind: input, shape index: {}]
  %s3 = inlined_call_operand.vmem [shape: bf16[32,32], index: 3, kind: input, shape index: {}]
  %s4 = inlined_call_operand.vmem [shape: f32[1,32], index: 4, kind: input, shape index: {}]
  %s5 = inlined_call_operand.vmem [shape: bf16[32,64], index: 5, kind: input, shape index: {}]
  %s6 = inlined_call_operand.vmem [shape: f32[1,64], index: 6, kind: input, shape index: {}]
  %s7 = inlined_call_operand.vmem [shape: bf16[32,32], index: 7, kind: input, shape index: {}]
  %s8 = inlined_call_operand.vmem [shape: f32[1,32], index: 8, kind: input, shape index: {}]
  %s9 = inlined_call_operand.vmem [shape: bf16[32,2048], index: 9, kind: input, shape index: {}]
  %s10 = inlined_call_operand.vmem [shape: f32[1,2048], index: 10, kind: input, shape index: {}]
  %s11 = inlined_call_operand.vmem [shape: bf16[2048,32], index: 11, kind: input, shape index: {}]
  %s12 = inlined_call_operand.vmem [shape: f32[1,32], index: 12, kind: input, shape index: {}]
  %s13 = inlined_call_operand.vmem [shape: f32[1,32], index: 13, kind: input, shape index: {}]
  %s14 = inlined_call_operand.vmem [shape: f32[1,32], index: 14, kind: input, shape index: {}]
  %s15 = inlined_call_operand.hbm [shape: f32[2,8,32], index: 15, kind: output, shape index: {}]
  %s16 = sld [smem:[#allocation0]]
  $region100: #{tpu_custom_call.1} parent=0
    _
  %s18 = ssub.s32 1, %s16
  %s19 = scalar_select 0, %s18, %s16
  $region1: #{tpu_custom_call.1} parent=0
    #allocation2 [shape = 'u8[8192]{0}', space=vmem, size = 0x2000, scoped, tag = 'output window, operand 0']
    #allocation3 [shape = 's32[2]{0}', space=sflag, size = 0x8, scoped, tag = 'scoped memory for tpu_custom_call.1']
    %20 = vsyncpa [#allocation3], 0
    %s21 = scalar_lea.sflag [#allocation3], 1
    %22 = vsyncpa %s21, 0
    loop: start=0, step=1, limit=4
    $region2: #{tpu_custom_call.1} parent=1 // loop_pre_header
      _
    $region3: #{tpu_custom_call.1} parent=1 // loop_header
      %s24 = sphi 0, %s28
      %p25 = scmp.ge.s32.totalorder %s24, 4
      %s31 = sphi 0, %s43
      %s32 = sphi 0, %s39
      %s33 = sphi 0, %s31
      %s34 = sphi 0, %s32
      %s35 = sphi 0, %s33
      %s36 = sphi 0, %s34
      %s48 = sphi 0, %s50
      %s51 = sphi 0, %s48
      %s52 = sphi 0, %s51
      %s68 = sphi 0, %s52
      %s74 = sphi 0, %s76
      %s77 = sphi 0, %s74
      %s78 = sphi 0, %s77
      %s94 = sphi 0, %s78
      %s102 = sphi 0, %s104
      %s105 = sphi 0, %s102
      %s106 = sphi 0, %s105
      %s122 = sphi 0, %s106
      %s126 = sphi 0, %s126
      %s128 = sphi 0, %s126
      %s129 = sphi 0, %s128
      %s143 = sphi 0, %s129
      %s147 = sphi 0, %s147
      %s149 = sphi 0, %s147
      %s150 = sphi 0, %s149
      %s164 = sphi 0, %s150
      %s168 = sphi 0, %s168
      %s170 = sphi 0, %s168
      %s171 = sphi 0, %s170
      %s185 = sphi 0, %s171
      %s189 = sphi 0, %s189
      %s191 = sphi 0, %s189
      %s192 = sphi 0, %s191
      %s206 = sphi 0, %s192
      %s210 = sphi 0, %s210
      %s212 = sphi 0, %s210
      %s213 = sphi 0, %s212
      %s227 = sphi 0, %s213
      %s231 = sphi 0, %s231
      %s233 = sphi 0, %s231
      %s234 = sphi 0, %s233
      %s248 = sphi 0, %s234
      %s252 = sphi 0, %s252
      %s254 = sphi 0, %s252
      %s255 = sphi 0, %s254
      %s269 = sphi 0, %s255
      %s273 = sphi 0, %s273
      %s275 = sphi 0, %s273
      %s276 = sphi 0, %s275
      %s290 = sphi 0, %s276
      %s294 = sphi 0, %s294
      %s296 = sphi 0, %s294
      %s297 = sphi 0, %s296
      %s311 = sphi 0, %s297
      %s315 = sphi 0, %s315
      %s317 = sphi 0, %s315
      %s318 = sphi 0, %s317
      %s332 = sphi 0, %s318
      %s336 = sphi 0, %s336
      %s338 = sphi 0, %s336
      %s339 = sphi 0, %s338
      %s353 = sphi 0, %s339
      %s357 = sphi 0, %s357
      %s359 = sphi 0, %s357
      %s360 = sphi 0, %s359
      %s374 = sphi 0, %s360
      %s382 = sphi 0, %s384
      %s385 = sphi 0, %s382
      %s386 = sphi 0, %s385
      %s402 = sphi 0, %s386
    $region4: #{tpu_custom_call.1} parent=1 // loop_header_branch
      %27 = sbr.rel (%p25) target = $region8
    $region5: #{tpu_custom_call.1} parent=1 // loop_body
      %s29 = ssub.s32 %s24, 1
      %s30 = ssub.s32 %s24, 2
      %s37 = sadd.s32 1, %s32
      %p38 = scmp.ge.s32.totalorder %s37, 1
      %s39 = scalar_select %p38, 0, %s37
      %s40 = sadd.s32 1, %s31
      %s41 = scalar_select %p38, %s40, %s31
      %p42 = scmp.ge.s32.totalorder %s41, 2
      %s43 = scalar_select %p42, 0, %s41
      %s44 = ssub.s32 %s31, %s43
      %s45 = ssub.s32 %s32, %s39
      %s46 = sor.u32 %s44, %s45
      %p47 = scmp.eq.s32.totalorder %s46, 0
      %s49 = sadd.s32 %s48, 1
      %s50 = scalar_select %p47, %s48, %s49
      %p53 = pneg %p47
      %p54 = scmp.eq.s32.totalorder %s24, 1
      %p55 = por %p53, %p54
      %p56 = scmp.ne.s32.totalorder %s48, %s51
      %p57 = scmp.eq.s32.totalorder %s24, 0
      %p58 = por %p56, %p57
      %p59 = scmp.ne.s32.totalorder %s48, %s51
      %p60 = scmp.eq.s32.totalorder %s29, 1
      %p61 = por %p59, %p60
      %p62 = scmp.ne.s32.totalorder %s51, %s52
      %p63 = scmp.eq.s32.totalorder %s29, 0
      %p64 = por %p62, %p63
      %p65 = scmp.ne.s32.totalorder %s51, %s52
      %p66 = scmp.eq.s32.totalorder %s30, 1
      %p67 = por %p65, %p66
      %p69 = scmp.ne.s32.totalorder %s52, %s68
      %p70 = scmp.eq.s32.totalorder %s30, 0
      %p71 = por %p69, %p70
      %s72 = ssub.s32 %s31, %s43
      %p73 = scmp.eq.s32.totalorder %s72, 0
      %s75 = sadd.s32 %s74, 1
      %s76 = scalar_select %p73, %s74, %s75
      %p79 = pneg %p73
      %p80 = scmp.eq.s32.totalorder %s24, 1
      %p81 = por %p79, %p80
      %p82 = scmp.ne.s32.totalorder %s74, %s77
      %p83 = scmp.eq.s32.totalorder %s24, 0
      %p84 = por %p82, %p83
      %p85 = scmp.ne.s32.totalorder %s74, %s77
      %p86 = scmp.eq.s32.totalorder %s29, 1
      %p87 = por %p85, %p86
      %p88 = scmp.ne.s32.totalorder %s77, %s78
      %p89 = scmp.eq.s32.totalorder %s29, 0
      %p90 = por %p88, %p89
      %p91 = scmp.ne.s32.totalorder %s77, %s78
      %p92 = scmp.eq.s32.totalorder %s30, 1
      %p93 = por %p91, %p92
      %p95 = scmp.ne.s32.totalorder %s78, %s94
      %p96 = scmp.eq.s32.totalorder %s30, 0
      %p97 = por %p95, %p96
      %s98 = ssub.s32 %s31, %s43
      %s99 = ssub.s32 %s32, %s39
      %s100 = sor.u32 %s98, %s99
      %p101 = scmp.eq.s32.totalorder %s100, 0
      %s103 = sadd.s32 %s102, 1
      %s104 = scalar_select %p101, %s102, %s103
      %p107 = pneg %p101
      %p108 = scmp.eq.s32.totalorder %s24, 1
      %p109 = por %p107, %p108
      %p110 = scmp.ne.s32.totalorder %s102, %s105
      %p111 = scmp.eq.s32.totalorder %s24, 0
      %p112 = por %p110, %p111
      %p113 = scmp.ne.s32.totalorder %s102, %s105
      %p114 = scmp.eq.s32.totalorder %s29, 1
      %p115 = por %p113, %p114
      %p116 = scmp.ne.s32.totalorder %s105, %s106
      %p117 = scmp.eq.s32.totalorder %s29, 0
      %p118 = por %p116, %p117
      %p119 = scmp.ne.s32.totalorder %s105, %s106
      %p120 = scmp.eq.s32.totalorder %s30, 1
      %p121 = por %p119, %p120
      %p123 = scmp.ne.s32.totalorder %s106, %s122
      %p124 = scmp.eq.s32.totalorder %s30, 0
      %p125 = por %p123, %p124
      %s127 = sadd.s32 %s126, 1
      %p130 = scmp.eq.s32.totalorder %s24, 1
      %p131 = scmp.ne.s32.totalorder %s126, %s128
      %p132 = scmp.eq.s32.totalorder %s24, 0
      %p133 = por %p131, %p132
      %p134 = scmp.ne.s32.totalorder %s126, %s128
      %p135 = scmp.eq.s32.totalorder %s29, 1
      %p136 = por %p134, %p135
      %p137 = scmp.ne.s32.totalorder %s128, %s129
      %p138 = scmp.eq.s32.totalorder %s29, 0
      %p139 = por %p137, %p138
      %p140 = scmp.ne.s32.totalorder %s128, %s129
      %p141 = scmp.eq.s32.totalorder %s30, 1
      %p142 = por %p140, %p141
      %p144 = scmp.ne.s32.totalorder %s129, %s143
      %p145 = scmp.eq.s32.totalorder %s30, 0
      %p146 = por %p144, %p145
      %s148 = sadd.s32 %s147, 1
      %p151 = scmp.eq.s32.totalorder %s24, 1
      %p152 = scmp.ne.s32.totalorder %s147, %s149
      %p153 = scmp.eq.s32.totalorder %s24, 0
      %p154 = por %p152, %p153
      %p155 = scmp.ne.s32.totalorder %s147, %s149
      %p156 = scmp.eq.s32.totalorder %s29, 1
      %p157 = por %p155, %p156
      %p158 = scmp.ne.s32.totalorder %s149, %s150
      %p159 = scmp.eq.s32.totalorder %s29, 0
      %p160 = por %p158, %p159
      %p161 = scmp.ne.s32.totalorder %s149, %s150
      %p162 = scmp.eq.s32.totalorder %s30, 1
      %p163 = por %p161, %p162
      %p165 = scmp.ne.s32.totalorder %s150, %s164
      %p166 = scmp.eq.s32.totalorder %s30, 0
      %p167 = por %p165, %p166
      %s169 = sadd.s32 %s168, 1
      %p172 = scmp.eq.s32.totalorder %s24, 1
      %p173 = scmp.ne.s32.totalorder %s168, %s170
      %p174 = scmp.eq.s32.totalorder %s24, 0
      %p175 = por %p173, %p174
      %p176 = scmp.ne.s32.totalorder %s168, %s170
      %p177 = scmp.eq.s32.totalorder %s29, 1
      %p178 = por %p176, %p177
      %p179 = scmp.ne.s32.totalorder %s170, %s171
      %p180 = scmp.eq.s32.totalorder %s29, 0
      %p181 = por %p179, %p180
      %p182 = scmp.ne.s32.totalorder %s170, %s171
      %p183 = scmp.eq.s32.totalorder %s30, 1
      %p184 = por %p182, %p183
      %p186 = scmp.ne.s32.totalorder %s171, %s185
      %p187 = scmp.eq.s32.totalorder %s30, 0
      %p188 = por %p186, %p187
      %s190 = sadd.s32 %s189, 1
      %p193 = scmp.eq.s32.totalorder %s24, 1
      %p194 = scmp.ne.s32.totalorder %s189, %s191
      %p195 = scmp.eq.s32.totalorder %s24, 0
      %p196 = por %p194, %p195
      %p197 = scmp.ne.s32.totalorder %s189, %s191
      %p198 = scmp.eq.s32.totalorder %s29, 1
      %p199 = por %p197, %p198
      %p200 = scmp.ne.s32.totalorder %s191, %s192
      %p201 = scmp.eq.s32.totalorder %s29, 0
      %p202 = por %p200, %p201
      %p203 = scmp.ne.s32.totalorder %s191, %s192
      %p204 = scmp.eq.s32.totalorder %s30, 1
      %p205 = por %p203, %p204
      %p207 = scmp.ne.s32.totalorder %s192, %s206
      %p208 = scmp.eq.s32.totalorder %s30, 0
      %p209 = por %p207, %p208
      %s211 = sadd.s32 %s210, 1
      %p214 = scmp.eq.s32.totalorder %s24, 1
      %p215 = scmp.ne.s32.totalorder %s210, %s212
      %p216 = scmp.eq.s32.totalorder %s24, 0
      %p217 = por %p215, %p216
      %p218 = scmp.ne.s32.totalorder %s210, %s212
      %p219 = scmp.eq.s32.totalorder %s29, 1
      %p220 = por %p218, %p219
      %p221 = scmp.ne.s32.totalorder %s212, %s213
      %p222 = scmp.eq.s32.totalorder %s29, 0
      %p223 = por %p221, %p222
      %p224 = scmp.ne.s32.totalorder %s212, %s213
      %p225 = scmp.eq.s32.totalorder %s30, 1
      %p226 = por %p224, %p225
      %p228 = scmp.ne.s32.totalorder %s213, %s227
      %p229 = scmp.eq.s32.totalorder %s30, 0
      %p230 = por %p228, %p229
      %s232 = sadd.s32 %s231, 1
      %p235 = scmp.eq.s32.totalorder %s24, 1
      %p236 = scmp.ne.s32.totalorder %s231, %s233
      %p237 = scmp.eq.s32.totalorder %s24, 0
      %p238 = por %p236, %p237
      %p239 = scmp.ne.s32.totalorder %s231, %s233
      %p240 = scmp.eq.s32.totalorder %s29, 1
      %p241 = por %p239, %p240
      %p242 = scmp.ne.s32.totalorder %s233, %s234
      %p243 = scmp.eq.s32.totalorder %s29, 0
      %p244 = por %p242, %p243
      %p245 = scmp.ne.s32.totalorder %s233, %s234
      %p246 = scmp.eq.s32.totalorder %s30, 1
      %p247 = por %p245, %p246
      %p249 = scmp.ne.s32.totalorder %s234, %s248
      %p250 = scmp.eq.s32.totalorder %s30, 0
      %p251 = por %p249, %p250
      %s253 = sadd.s32 %s252, 1
      %p256 = scmp.eq.s32.totalorder %s24, 1
      %p257 = scmp.ne.s32.totalorder %s252, %s254
      %p258 = scmp.eq.s32.totalorder %s24, 0
      %p259 = por %p257, %p258
      %p260 = scmp.ne.s32.totalorder %s252, %s254
      %p261 = scmp.eq.s32.totalorder %s29, 1
      %p262 = por %p260, %p261
      %p263 = scmp.ne.s32.totalorder %s254, %s255
      %p264 = scmp.eq.s32.totalorder %s29, 0
      %p265 = por %p263, %p264
      %p266 = scmp.ne.s32.totalorder %s254, %s255
      %p267 = scmp.eq.s32.totalorder %s30, 1
      %p268 = por %p266, %p267
      %p270 = scmp.ne.s32.totalorder %s255, %s269
      %p271 = scmp.eq.s32.totalorder %s30, 0
      %p272 = por %p270, %p271
      %s274 = sadd.s32 %s273, 1
      %p277 = scmp.eq.s32.totalorder %s24, 1
      %p278 = scmp.ne.s32.totalorder %s273, %s275
      %p279 = scmp.eq.s32.totalorder %s24, 0
      %p280 = por %p278, %p279
      %p281 = scmp.ne.s32.totalorder %s273, %s275
      %p282 = scmp.eq.s32.totalorder %s29, 1
      %p283 = por %p281, %p282
      %p284 = scmp.ne.s32.totalorder %s275, %s276
      %p285 = scmp.eq.s32.totalorder %s29, 0
      %p286 = por %p284, %p285
      %p287 = scmp.ne.s32.totalorder %s275, %s276
      %p288 = scmp.eq.s32.totalorder %s30, 1
      %p289 = por %p287, %p288
      %p291 = scmp.ne.s32.totalorder %s276, %s290
      %p292 = scmp.eq.s32.totalorder %s30, 0
      %p293 = por %p291, %p292
      %s295 = sadd.s32 %s294, 1
      %p298 = scmp.eq.s32.totalorder %s24, 1
      %p299 = scmp.ne.s32.totalorder %s294, %s296
      %p300 = scmp.eq.s32.totalorder %s24, 0
      %p301 = por %p299, %p300
      %p302 = scmp.ne.s32.totalorder %s294, %s296
      %p303 = scmp.eq.s32.totalorder %s29, 1
      %p304 = por %p302, %p303
      %p305 = scmp.ne.s32.totalorder %s296, %s297
      %p306 = scmp.eq.s32.totalorder %s29, 0
      %p307 = por %p305, %p306
      %p308 = scmp.ne.s32.totalorder %s296, %s297
      %p309 = scmp.eq.s32.totalorder %s30, 1
      %p310 = por %p308, %p309
      %p312 = scmp.ne.s32.totalorder %s297, %s311
      %p313 = scmp.eq.s32.totalorder %s30, 0
      %p314 = por %p312, %p313
      %s316 = sadd.s32 %s315, 1
      %p319 = scmp.eq.s32.totalorder %s24, 1
      %p320 = scmp.ne.s32.totalorder %s315, %s317
      %p321 = scmp.eq.s32.totalorder %s24, 0
      %p322 = por %p320, %p321
      %p323 = scmp.ne.s32.totalorder %s315, %s317
      %p324 = scmp.eq.s32.totalorder %s29, 1
      %p325 = por %p323, %p324
      %p326 = scmp.ne.s32.totalorder %s317, %s318
      %p327 = scmp.eq.s32.totalorder %s29, 0
      %p328 = por %p326, %p327
      %p329 = scmp.ne.s32.totalorder %s317, %s318
      %p330 = scmp.eq.s32.totalorder %s30, 1
      %p331 = por %p329, %p330
      %p333 = scmp.ne.s32.totalorder %s318, %s332
      %p334 = scmp.eq.s32.totalorder %s30, 0
      %p335 = por %p333, %p334
      %s337 = sadd.s32 %s336, 1
      %p340 = scmp.eq.s32.totalorder %s24, 1
      %p341 = scmp.ne.s32.totalorder %s336, %s338
      %p342 = scmp.eq.s32.totalorder %s24, 0
      %p343 = por %p341, %p342
      %p344 = scmp.ne.s32.totalorder %s336, %s338
      %p345 = scmp.eq.s32.totalorder %s29, 1
      %p346 = por %p344, %p345
      %p347 = scmp.ne.s32.totalorder %s338, %s339
      %p348 = scmp.eq.s32.totalorder %s29, 0
      %p349 = por %p347, %p348
      %p350 = scmp.ne.s32.totalorder %s338, %s339
      %p351 = scmp.eq.s32.totalorder %s30, 1
      %p352 = por %p350, %p351
      %p354 = scmp.ne.s32.totalorder %s339, %s353
      %p355 = scmp.eq.s32.totalorder %s30, 0
      %p356 = por %p354, %p355
      %s358 = sadd.s32 %s357, 1
      %p361 = scmp.eq.s32.totalorder %s24, 1
      %p362 = scmp.ne.s32.totalorder %s357, %s359
      %p363 = scmp.eq.s32.totalorder %s24, 0
      %p364 = por %p362, %p363
      %p365 = scmp.ne.s32.totalorder %s357, %s359
      %p366 = scmp.eq.s32.totalorder %s29, 1
      %p367 = por %p365, %p366
      %p368 = scmp.ne.s32.totalorder %s359, %s360
      %p369 = scmp.eq.s32.totalorder %s29, 0
      %p370 = por %p368, %p369
      %p371 = scmp.ne.s32.totalorder %s359, %s360
      %p372 = scmp.eq.s32.totalorder %s30, 1
      %p373 = por %p371, %p372
      %p375 = scmp.ne.s32.totalorder %s360, %s374
      %p376 = scmp.eq.s32.totalorder %s30, 0
      %p377 = por %p375, %p376
      %s378 = ssub.s32 %s31, %s43
      %s379 = ssub.s32 %s32, %s39
      %s380 = sor.u32 %s378, %s379
      %p381 = scmp.eq.s32.totalorder %s380, 0
      %s383 = sadd.s32 %s382, 1
      %s384 = scalar_select %p381, %s382, %s383
      %p387 = pneg %p381
      %p388 = scmp.eq.s32.totalorder %s24, 1
      %p389 = por %p387, %p388
      %p390 = scmp.ne.s32.totalorder %s382, %s385
      %p391 = scmp.eq.s32.totalorder %s24, 0
      %p392 = por %p390, %p391
      %p393 = scmp.ne.s32.totalorder %s382, %s385
      %p394 = scmp.eq.s32.totalorder %s29, 1
      %p395 = por %p393, %p394
      %p396 = scmp.ne.s32.totalorder %s385, %s386
      %p397 = scmp.eq.s32.totalorder %s29, 0
      %p398 = por %p396, %p397
      %p399 = scmp.ne.s32.totalorder %s385, %s386
      %p400 = scmp.eq.s32.totalorder %s30, 1
      %p401 = por %p399, %p400
      %p403 = scmp.ne.s32.totalorder %s386, %s402
      %p404 = scmp.eq.s32.totalorder %s30, 0
      %p405 = por %p403, %p404
      %p406 = scmp.le.s32.totalorder 1, %s24
      %p407 = scmp.lt.s32.totalorder %s24, 3
      %p408 = pnand %p406, %p407
      %p409 = pneg %p408
      // Predicated region
      $region9: #{tpu_custom_call.1} parent=5 // pred_check
        _
      $region10: #{tpu_custom_call.1} parent=5 // pred_check_branch
        %411 = sbr.rel (%p408) target = $region12
      $region11: #{tpu_custom_call.1} parent=5 // pred_region
        %s412 = ssub.s32 %s24, 1
        // Predicated region
        $region13: #{tpu_custom_call.1} parent=11 // pred_check
          %p413 = pneg %p139
        $region14: #{tpu_custom_call.1} parent=11 // pred_check_branch
          %415 = sbr.rel (%p413) target = $region16
        $region15: #{tpu_custom_call.1} parent=11 // pred_region
          _
        $region16: #{tpu_custom_call.1} parent=11 // pred_fallthru
          _
        // Predicated region
        $region17: #{tpu_custom_call.1} parent=11 // pred_check
          %p416 = pneg %p160
        $region18: #{tpu_custom_call.1} parent=11 // pred_check_branch
          %418 = sbr.rel (%p416) target = $region20
        $region19: #{tpu_custom_call.1} parent=11 // pred_region
          _
        $region20: #{tpu_custom_call.1} parent=11 // pred_fallthru
          _
        // Predicated region
        $region21: #{tpu_custom_call.1} parent=11 // pred_check
          %p419 = pneg %p181
        $region22: #{tpu_custom_call.1} parent=11 // pred_check_branch
          %421 = sbr.rel (%p419) target = $region24
        $region23: #{tpu_custom_call.1} parent=11 // pred_region
          _
        $region24: #{tpu_custom_call.1} parent=11 // pred_fallthru
          _
        // Predicated region
        $region25: #{tpu_custom_call.1} parent=11 // pred_check
          %p422 = pneg %p202
        $region26: #{tpu_custom_call.1} parent=11 // pred_check_branch
          %424 = sbr.rel (%p422) target = $region28
        $region27: #{tpu_custom_call.1} parent=11 // pred_region
          _
        $region28: #{tpu_custom_call.1} parent=11 // pred_fallthru
          _
        // Predicated region
        $region29: #{tpu_custom_call.1} parent=11 // pred_check
          %p425 = pneg %p223
        $region30: #{tpu_custom_call.1} parent=11 // pred_check_branch
          %427 = sbr.rel (%p425) target = $region32
        $region31: #{tpu_custom_call.1} parent=11 // pred_region
          _
        $region32: #{tpu_custom_call.1} parent=11 // pred_fallthru
          _
        // Predicated region
        $region33: #{tpu_custom_call.1} parent=11 // pred_check
          %p428 = pneg %p244
        $region34: #{tpu_custom_call.1} parent=11 // pred_check_branch
          %430 = sbr.rel (%p428) target = $region36
        $region35: #{tpu_custom_call.1} parent=11 // pred_region
          _
        $region36: #{tpu_custom_call.1} parent=11 // pred_fallthru
          _
        // Predicated region
        $region37: #{tpu_custom_call.1} parent=11 // pred_check
          %p431 = pneg %p265
        $region38: #{tpu_custom_call.1} parent=11 // pred_check_branch
          %433 = sbr.rel (%p431) target = $region40
        $region39: #{tpu_custom_call.1} parent=11 // pred_region
          _
        $region40: #{tpu_custom_call.1} parent=11 // pred_fallthru
          _
        // Predicated region
        $region41: #{tpu_custom_call.1} parent=11 // pred_check
          %p434 = pneg %p286
        $region42: #{tpu_custom_call.1} parent=11 // pred_check_branch
          %436 = sbr.rel (%p434) target = $region44
        $region43: #{tpu_custom_call.1} parent=11 // pred_region
          _
        $region44: #{tpu_custom_call.1} parent=11 // pred_fallthru
          _
        // Predicated region
        $region45: #{tpu_custom_call.1} parent=11 // pred_check
          %p437 = pneg %p307
        $region46: #{tpu_custom_call.1} parent=11 // pred_check_branch
          %439 = sbr.rel (%p437) target = $region48
        $region47: #{tpu_custom_call.1} parent=11 // pred_region
          _
        $region48: #{tpu_custom_call.1} parent=11 // pred_fallthru
          _
        // Predicated region
        $region49: #{tpu_custom_call.1} parent=11 // pred_check
          %p440 = pneg %p328
        $region50: #{tpu_custom_call.1} parent=11 // pred_check_branch
          %442 = sbr.rel (%p440) target = $region52
        $region51: #{tpu_custom_call.1} parent=11 // pred_region
          _
        $region52: #{tpu_custom_call.1} parent=11 // pred_fallthru
          _
        // Predicated region
        $region53: #{tpu_custom_call.1} parent=11 // pred_check
          %p443 = pneg %p349
        $region54: #{tpu_custom_call.1} parent=11 // pred_check_branch
          %445 = sbr.rel (%p443) target = $region56
        $region55: #{tpu_custom_call.1} parent=11 // pred_region
          _
        $region56: #{tpu_custom_call.1} parent=11 // pred_fallthru
          _
        // Predicated region
        $region57: #{tpu_custom_call.1} parent=11 // pred_check
          %p446 = pneg %p370
        $region58: #{tpu_custom_call.1} parent=11 // pred_check_branch
          %448 = sbr.rel (%p446) target = $region60
        $region59: #{tpu_custom_call.1} parent=11 // pred_region
          _
        $region60: #{tpu_custom_call.1} parent=11 // pred_fallthru
          _
      $region12: #{tpu_custom_call.1} parent=5 // pred_fallthru
        _
      %p449 = scmp.lt.s32.totalorder %s24, 2
      // Predicated region
      $region61: #{tpu_custom_call.1} parent=5 // pred_check
        %p450 = pneg %p449
      $region62: #{tpu_custom_call.1} parent=5 // pred_check_branch
        %452 = sbr.rel (%p450) target = $region64
      $region63: #{tpu_custom_call.1} parent=5 // pred_region
        // Predicated region
        $region65: #{tpu_custom_call.1} parent=63 // pred_check
          %p453 = pneg %p58
        $region66: #{tpu_custom_call.1} parent=63 // pred_check_branch
          %455 = sbr.rel (%p453) target = $region68
        $region67: #{tpu_custom_call.1} parent=63 // pred_region
          %p456 = scmp.lt.s32.totalorder %s31, 1
          %s457 = scalar_select %p456, %s31, 1
          %p458 = scmp.lt.s32.totalorder %s32, 0
          %s459 = scalar_select %p458, %s32, 0
          %s460 = sadd.s32 %s459, %s457
          %s461 = smul.addr %s460, 8
          %s462 = scalar_lea.vmem %s0, %s461
        $region68: #{tpu_custom_call.1} parent=63 // pred_fallthru
          _
        // Predicated region
        $region69: #{tpu_custom_call.1} parent=63 // pred_check
          %p463 = pneg %p84
        $region70: #{tpu_custom_call.1} parent=63 // pred_check_branch
          %465 = sbr.rel (%p463) target = $region72
        $region71: #{tpu_custom_call.1} parent=63 // pred_region
          %p466 = scmp.lt.s32.totalorder %s31, 1
          %s467 = scalar_select %p466, %s31, 1
          %s468 = smul.addr %s467, 8
          %s469 = scalar_lea.vmem %s1, %s468
        $region72: #{tpu_custom_call.1} parent=63 // pred_fallthru
          _
        // Predicated region
        $region73: #{tpu_custom_call.1} parent=63 // pred_check
          %p470 = pneg %p112
        $region74: #{tpu_custom_call.1} parent=63 // pred_check_branch
          %472 = sbr.rel (%p470) target = $region76
        $region75: #{tpu_custom_call.1} parent=63 // pred_region
          %p473 = scmp.lt.s32.totalorder %s31, 1
          %s474 = scalar_select %p473, %s31, 1
          %p475 = scmp.lt.s32.totalorder %s32, 0
          %s476 = scalar_select %p475, %s32, 0
          %s477 = sadd.s32 %s476, %s474
          %s478 = smul.addr %s477, 4
          %s479 = scalar_lea.vmem %s2, %s478
        $region76: #{tpu_custom_call.1} parent=63 // pred_fallthru
          _
      $region64: #{tpu_custom_call.1} parent=5 // pred_fallthru
        _
      %p480 = scmp.le.s32.totalorder 1, %s24
      %p481 = scmp.lt.s32.totalorder %s24, 3
      %p482 = pnand %p480, %p481
      %p483 = pneg %p482
      // Predicated region
      $region77: #{tpu_custom_call.1} parent=5 // pred_check
        _
      $region78: #{tpu_custom_call.1} parent=5 // pred_check_branch
        %485 = sbr.rel (%p482) target = $region80
      $region79: #{tpu_custom_call.1} parent=5 // pred_region
        %s486 = ssub.s32 %s24, 1
        %p487 = scmp.lt.s32.totalorder %s33, 1
        %s488 = scalar_select %p487, %s33, 1
        %p489 = scmp.lt.s32.totalorder %s34, 0
        %s490 = scalar_select %p489, %s34, 0
        %s491 = sadd.s32 %s490, %s488
        %s492 = smul.addr %s491, 8
        %s493 = scalar_lea.vmem %s0, %s492
        %p494 = pneg %p64
        %p495 = pneg %p61
        %p496 = scmp.lt.s32.totalorder %s33, 1
        %s497 = scalar_select %p496, %s33, 1
        %s498 = smul.addr %s497, 8
        %s499 = scalar_lea.vmem %s1, %s498
        %p500 = pneg %p90
        %p501 = pneg %p87
        %p502 = scmp.lt.s32.totalorder %s33, 1
        %s503 = scalar_select %p502, %s33, 1
        %p504 = scmp.lt.s32.totalorder %s34, 0
        %s505 = scalar_select %p504, %s34, 0
        %s506 = sadd.s32 %s505, %s503
        %s507 = smul.addr %s506, 4
        %s508 = scalar_lea.vmem %s2, %s507
        %p509 = pneg %p118
        %p510 = pneg %p115
        %p511 = pneg %p139
        %p512 = pneg %p136
        %p513 = pneg %p160
        %p514 = pneg %p157
        %p515 = pneg %p181
        %p516 = pneg %p178
        %p517 = pneg %p202
        %p518 = pneg %p199
        %p519 = pneg %p223
        %p520 = pneg %p220
        %p521 = pneg %p244
        %p522 = pneg %p241
        %p523 = pneg %p265
        %p524 = pneg %p262
        %p525 = pneg %p286
        %p526 = pneg %p283
        %p527 = pneg %p307
        %p528 = pneg %p304
        %p529 = pneg %p328
        %p530 = pneg %p325
        %p531 = pneg %p349
        %p532 = pneg %p346
        %p533 = pneg %p370
        %p534 = pneg %p367
        %p535 = pneg %p398
        %p536 = pneg %p395
        %s537 = sand.u32 %s385, 1
        %s538 = scalar_lea.sflag [#allocation3], %s537
        %s539 = sand.u32 %s385, 1
        %s540 = smul.addr %s539, 8
        %s541 = scalar_lea.vmem [#allocation2], %s540
        %p542 = scmp.lt.s32.totalorder %s33, 1
        %s543 = scalar_select %p542, %s33, 1
        %p544 = scmp.lt.s32.totalorder %s34, 0
        %s545 = scalar_select %p544, %s34, 0
        %s546 = sadd.s32 %s545, %s543
        %s547 = smul.addr %s546, 8
        %s548 = scalar_lea.vmem %s0, %s547
        %p549 = scmp.lt.s32.totalorder %s33, 1
        %s550 = scalar_select %p549, %s33, 1
        %s551 = smul.addr %s550, 8
        %s552 = scalar_lea.vmem %s1, %s551
        %p553 = scmp.lt.s32.totalorder %s33, 1
        %s554 = scalar_select %p553, %s33, 1
        %p555 = scmp.lt.s32.totalorder %s34, 0
        %s556 = scalar_select %p555, %s34, 0
        %s557 = sadd.s32 %s556, %s554
        %s558 = smul.addr %s557, 4
        %s559 = scalar_lea.vmem %s2, %s558
        %v561 = vld [vmem:[%s548] sm:$0xff]
        %v562 = vld [vmem:[%s552] sm:$0xff]
        %v563 = vld [vmem:[%s559] sm:$0xf]
        %v564 = vld [vmem:[%s13] sm:$0x1]
        %v565 = vld [vmem:[%s14] sm:$0x1]
        %v566 = vpack.c.bf16 %v561, %v561
        %v567 = vpack.c.bf16 %v562, %v562
        %v568 = vld [vmem:[%s3] sm:$0xf]
        %v569 = vld [vmem:[%s3 + $0x4] sm:$0xf]
        %v570 = vld [vmem:[%s3 + $0x8] sm:$0xf]
        %v571 = vld [vmem:[%s3 + $0xc] sm:$0xf]
        %v572 = vld [vmem:[%s4] sm:$0x1]
        %v574 = vperm.slane %v572, 0
        %v580 = vunpack.c.l.b16 %v568
        %v581 = vunpack.c.l.b16 %v569
        %v582 = vunpack.c.l.b16 %v570
        %v583 = vunpack.c.l.b16 %v571
        %v584 = vpack.c.b16 %v581, %v580
        %v585 = vpack.c.b16 %v583, %v582
        %vm588 = vcmask 261120
        %v590 = vsel %vm588, %v566, 0
        %592 = vmatpush.bf16.msra.mxu0 0
        %593 = vmatpush.bf16.msra.mxu0 0
        %594 = vmatpush.bf16.msra.mxu0 0
        %595 = vmatpush.bf16.msra.mxu0 0
        %596 = vmatpush.bf16.msra.mxu0 0
        %597 = vmatpush.bf16.msra.mxu0 0
        %598 = vmatpush.bf16.msra.mxu0 %v585
        %599 = vmatpush.bf16.msra.mxu0 %v584
        %600 = vmatmul.bf16.gmra.mxu0 %v590
        %v601 = vpop.f32.mrf.mxu0
        %v602 = vadd.f32 %v574, %v601
        %v603 = vpop.f32.mrf.mxu0
        %604 = vdwg.mxu0
        %v605 = vpack.c.bf16 %v602, %v602
        %v606 = vld [vmem:[%s5] sm:$0xf]
        %v607 = vld [vmem:[%s5 + $0x4] sm:$0xf]
        %v608 = vld [vmem:[%s5 + $0x8] sm:$0xf]
        %v609 = vld [vmem:[%s5 + $0xc] sm:$0xf]
        %v610 = vld [vmem:[%s6] sm:$0x1]
        %v612 = vperm.slane %v610, 0
        %v618 = vunpack.c.l.b16 %v606
        %v619 = vunpack.c.l.b16 %v607
        %v620 = vunpack.c.l.b16 %v608
        %v621 = vunpack.c.l.b16 %v609
        %v622 = vpack.c.b16 %v619, %v618
        %v623 = vpack.c.b16 %v621, %v620
        %v627 = vsel %vm588, %v567, 0
        %629 = vmatpush.bf16.msra.mxu0 0
        %630 = vmatpush.bf16.msra.mxu0 0
        %631 = vmatpush.bf16.msra.mxu0 0
        %632 = vmatpush.bf16.msra.mxu0 0
        %633 = vmatpush.bf16.msra.mxu0 0
        %634 = vmatpush.bf16.msra.mxu0 0
        %635 = vmatpush.bf16.msra.mxu0 %v623
        %636 = vmatpush.bf16.msra.mxu0 %v622
        %637 = vmatmul.bf16.gmra.mxu0 %v627
        %v638 = vpop.f32.mrf.mxu0
        %v639 = vadd.f32 %v612, %v638
        %v640 = vpop.f32.mrf.mxu0
        %641 = vdwg.mxu0
        %v642 = vpack.c.bf16 %v639, %v639
        %v643 = vunpack.c.l.bf16 %v563
        %vm644 = vcmp.eq.f32.partialorder %v643, 0.0
        %vm645 = vcmask 64512
        %v647 = vsel %vm645, %v605, 0
        %v650 = vsel %vm645, %v642, 0
        %652 = vmatpush.bf16.xpose.msra.mxu0 0
        %653 = vmatpush.bf16.xpose.msra.mxu0 0
        %654 = vmatpush.bf16.xpose.msra.mxu0 0
        %655 = vmatpush.bf16.xpose.msra.mxu0 0
        %656 = vmatpush.bf16.xpose.msra.mxu0 0
        %657 = vmatpush.bf16.xpose.msra.mxu0 0
        %658 = vmatpush.bf16.xpose.msra.mxu0 0
        %659 = vmatpush.bf16.xpose.msra.mxu0 %v650
        %660 = vmatmul.bf16.gmra.mxu0 %v647
        %v661 = vpop.f32.mrf.mxu0
        %v662 = vadd.f32 0.0, %v661
        %v663 = vpop.f32.mrf.mxu0
        %664 = vdwg.mxu0
        %v665 = vmul.f32 %v662, 0.35355338
        %v666 = vsel %vm644, -1e+09, %v665
        %v667 = vsel %vm645, %v666, -inf
        %668 = vmax.xlane.f32.xlu0 %v667
        %v669 = vpop.xlane.xlu0 %668
        %v670 = vsub.f32 %v666, %v669
        %v671 = vmul.f32 %v670, 1.442695
        %v672 = vpow.pop %v671
        %v673 = vsel %vm645, %v672, 0.0
        %674 = vadd.xlane.f32.xlu0 %v673
        %v675 = vpop.xlane.xlu0 %674
        %v676 = vrcp.pop %v675
        %v677 = vmul.f32 %v672, %v676
        %v678 = vpack.c.bf16 %v677, %v677
        %v680 = vunpack.c.l.b16 %v642
        %v681 = vpack.c.b16 %v680, %v680
        %682 = vrot.lane.b32.xlu0 %v681, 96
        %v683 = vpop.permute.xlu0 %682
        %v685 = vsel %vm645, %v678, 0
        %vm687 = vcmask 1043456
        %v689 = vsel %vm687, %v683, 0
        %691 = vmatpush.bf16.msra.mxu0 0
        %692 = vmatpush.bf16.msra.mxu0 0
        %693 = vmatpush.bf16.msra.mxu0 0
        %694 = vmatpush.bf16.msra.mxu0 0
        %695 = vmatpush.bf16.msra.mxu0 0
        %696 = vmatpush.bf16.msra.mxu0 0
        %697 = vmatpush.bf16.msra.mxu0 0
        %698 = vmatpush.bf16.msra.mxu0 %v689
        %699 = vmatmul.bf16.gmra.mxu0 %v685
        %v700 = vpop.f32.mrf.mxu0
        %v701 = vadd.f32 0.0, %v700
        %v702 = vpop.f32.mrf.mxu0
        %703 = vdwg.mxu0
        %v704 = vpack.c.bf16 %v701, %v701
        %v705 = vld [vmem:[%s7] sm:$0xf]
        %v707 = vunpack.c.l.b16 %v605
        %v708 = vpack.c.b16 %v707, %v707
        %709 = vrot.lane.b32.xlu0 %v708, 120
        %v710 = vpop.permute.xlu0 %709
        %711 = vrot.lane.b32.xlu0 %v681, 120
        %v712 = vpop.permute.xlu0 %711
        %v714 = vsel %vm645, %v710, 0
        %v717 = vsel %vm645, %v712, 0
        %719 = vmatpush.bf16.xpose.msra.mxu0 0
        %720 = vmatpush.bf16.xpose.msra.mxu0 0
        %721 = vmatpush.bf16.xpose.msra.mxu0 0
        %722 = vmatpush.bf16.xpose.msra.mxu0 0
        %723 = vmatpush.bf16.xpose.msra.mxu0 0
        %724 = vmatpush.bf16.xpose.msra.mxu0 0
        %725 = vmatpush.bf16.xpose.msra.mxu0 0
        %726 = vmatpush.bf16.xpose.msra.mxu0 %v717
        %727 = vmatmul.bf16.gmra.mxu0 %v714
        %v728 = vpop.f32.mrf.mxu0
        %v729 = vadd.f32 0.0, %v728
        %v730 = vpop.f32.mrf.mxu0
        %731 = vdwg.mxu0
        %v732 = vmul.f32 %v729, 0.35355338
        %v733 = vsel %vm644, -1e+09, %v732
        %v734 = vsel %vm645, %v733, -inf
        %735 = vmax.xlane.f32.xlu0 %v734
        %v736 = vpop.xlane.xlu0 %735
        %v737 = vsub.f32 %v733, %v736
        %v738 = vmul.f32 %v737, 1.442695
        %v739 = vpow.pop %v738
        %v740 = vsel %vm645, %v739, 0.0
        %741 = vadd.xlane.f32.xlu0 %v740
        %v742 = vpop.xlane.xlu0 %741
        %v743 = vrcp.pop %v742
        %v744 = vmul.f32 %v739, %v743
        %v745 = vpack.c.bf16 %v744, %v744
        %746 = vrot.lane.b32.xlu0 %v681, 88
        %v747 = vpop.permute.xlu0 %746
        %v749 = vsel %vm645, %v745, 0
        %v752 = vsel %vm687, %v747, 0
        %754 = vmatpush.bf16.msra.mxu0 0
        %755 = vmatpush.bf16.msra.mxu0 0
        %756 = vmatpush.bf16.msra.mxu0 0
        %757 = vmatpush.bf16.msra.mxu0 0
        %758 = vmatpush.bf16.msra.mxu0 0
        %759 = vmatpush.bf16.msra.mxu0 0
        %760 = vmatpush.bf16.msra.mxu0 0
        %761 = vmatpush.bf16.msra.mxu0 %v752
        %762 = vmatmul.bf16.gmra.mxu0 %v749
        %v763 = vpop.f32.mrf.mxu0
        %v764 = vadd.f32 0.0, %v763
        %v765 = vpop.f32.mrf.mxu0
        %766 = vdwg.mxu0
        %v767 = vpack.c.bf16 %v764, %v764
        %v768 = vld [vmem:[%s7 + $0x4] sm:$0xf]
        %v770 = vsel %vm645, %v767, 0
        %v773 = vsel %vm687, %v768, 0
        %775 = vmatpush.bf16.msra.mxu0 0
        %776 = vmatpush.bf16.msra.mxu0 0
        %777 = vmatpush.bf16.msra.mxu0 0
        %778 = vmatpush.bf16.msra.mxu0 0
        %779 = vmatpush.bf16.msra.mxu0 0
        %780 = vmatpush.bf16.msra.mxu0 0
        %781 = vmatpush.bf16.msra.mxu0 0
        %782 = vmatpush.bf16.msra.mxu0 %v773
        %783 = vmatmul.bf16.gmra.mxu0 %v770
        %v784 = vpop.f32.mrf.mxu0
        %v785 = vadd.f32 0.0, %v784
        %v786 = vpop.f32.mrf.mxu0
        %787 = vdwg.mxu0
        %v789 = vsel %vm645, %v704, 0
        %v792 = vsel %vm687, %v705, 0
        %794 = vmatpush.bf16.msra.mxu0 0
        %795 = vmatpush.bf16.msra.mxu0 0
        %796 = vmatpush.bf16.msra.mxu0 0
        %797 = vmatpush.bf16.msra.mxu0 0
        %798 = vmatpush.bf16.msra.mxu0 0
        %799 = vmatpush.bf16.msra.mxu0 0
        %800 = vmatpush.bf16.msra.mxu0 0
        %801 = vmatpush.bf16.msra.mxu0 %v792
        %802 = vmatmul.bf16.gmra.mxu0 %v789
        %v803 = vpop.f32.mrf.mxu0
        %v804 = vadd.f32 %v785, %v803
        %v805 = vpop.f32.mrf.mxu0
        %806 = vdwg.mxu0
        %807 = vrot.lane.b32.xlu0 %v708, 112
        %v808 = vpop.permute.xlu0 %807
        %809 = vrot.lane.b32.xlu0 %v681, 112
        %v810 = vpop.permute.xlu0 %809
        %v812 = vsel %vm645, %v808, 0
        %v815 = vsel %vm645, %v810, 0
        %817 = vmatpush.bf16.xpose.msra.mxu0 0
        %818 = vmatpush.bf16.xpose.msra.mxu0 0
        %819 = vmatpush.bf16.xpose.msra.mxu0 0
        %820 = vmatpush.bf16.xpose.msra.mxu0 0
        %821 = vmatpush.bf16.xpose.msra.mxu0 0
        %822 = vmatpush.bf16.xpose.msra.mxu0 0
        %823 = vmatpush.bf16.xpose.msra.mxu0 0
        %824 = vmatpush.bf16.xpose.msra.mxu0 %v815
        %825 = vmatmul.bf16.gmra.mxu0 %v812
        %v826 = vpop.f32.mrf.mxu0
        %v827 = vadd.f32 0.0, %v826
        %v828 = vpop.f32.mrf.mxu0
        %829 = vdwg.mxu0
        %v830 = vmul.f32 %v827, 0.35355338
        %v831 = vsel %vm644, -1e+09, %v830
        %v832 = vsel %vm645, %v831, -inf
        %833 = vmax.xlane.f32.xlu0 %v832
        %v834 = vpop.xlane.xlu0 %833
        %v835 = vsub.f32 %v831, %v834
        %v836 = vmul.f32 %v835, 1.442695
        %v837 = vpow.pop %v836
        %v838 = vsel %vm645, %v837, 0.0
        %839 = vadd.xlane.f32.xlu0 %v838
        %v840 = vpop.xlane.xlu0 %839
        %v841 = vrcp.pop %v840
        %v842 = vmul.f32 %v837, %v841
        %v843 = vpack.c.bf16 %v842, %v842
        %844 = vrot.lane.b32.xlu0 %v681, 80
        %v845 = vpop.permute.xlu0 %844
        %v847 = vsel %vm645, %v843, 0
        %v850 = vsel %vm687, %v845, 0
        %852 = vmatpush.bf16.msra.mxu0 0
        %853 = vmatpush.bf16.msra.mxu0 0
        %854 = vmatpush.bf16.msra.mxu0 0
        %855 = vmatpush.bf16.msra.mxu0 0
        %856 = vmatpush.bf16.msra.mxu0 0
        %857 = vmatpush.bf16.msra.mxu0 0
        %858 = vmatpush.bf16.msra.mxu0 0
        %859 = vmatpush.bf16.msra.mxu0 %v850
        %860 = vmatmul.bf16.gmra.mxu0 %v847
        %v861 = vpop.f32.mrf.mxu0
        %v862 = vadd.f32 0.0, %v861
        %v863 = vpop.f32.mrf.mxu0
        %864 = vdwg.mxu0
        %v865 = vpack.c.bf16 %v862, %v862
        %v866 = vld [vmem:[%s7 + $0x8] sm:$0xf]
        %v868 = vsel %vm645, %v865, 0
        %v871 = vsel %vm687, %v866, 0
        %873 = vmatpush.bf16.msra.mxu0 0
        %874 = vmatpush.bf16.msra.mxu0 0
        %875 = vmatpush.bf16.msra.mxu0 0
        %876 = vmatpush.bf16.msra.mxu0 0
        %877 = vmatpush.bf16.msra.mxu0 0
        %878 = vmatpush.bf16.msra.mxu0 0
        %879 = vmatpush.bf16.msra.mxu0 0
        %880 = vmatpush.bf16.msra.mxu0 %v871
        %881 = vmatmul.bf16.gmra.mxu0 %v868
        %v882 = vpop.f32.mrf.mxu0
        %v883 = vadd.f32 0.0, %v882
        %v884 = vpop.f32.mrf.mxu0
        %885 = vdwg.mxu0
        %v886 = vadd.f32 %v804, %v883
        %887 = vrot.lane.b32.xlu0 %v708, 104
        %v888 = vpop.permute.xlu0 %887
        %889 = vrot.lane.b32.xlu0 %v681, 104
        %v890 = vpop.permute.xlu0 %889
        %v892 = vsel %vm645, %v888, 0
        %v895 = vsel %vm645, %v890, 0
        %897 = vmatpush.bf16.xpose.msra.mxu0 0
        %898 = vmatpush.bf16.xpose.msra.mxu0 0
        %899 = vmatpush.bf16.xpose.msra.mxu0 0
        %900 = vmatpush.bf16.xpose.msra.mxu0 0
        %901 = vmatpush.bf16.xpose.msra.mxu0 0
        %902 = vmatpush.bf16.xpose.msra.mxu0 0
        %903 = vmatpush.bf16.xpose.msra.mxu0 0
        %904 = vmatpush.bf16.xpose.msra.mxu0 %v895
        %905 = vmatmul.bf16.gmra.mxu0 %v892
        %v906 = vpop.f32.mrf.mxu0
        %v907 = vadd.f32 0.0, %v906
        %v908 = vpop.f32.mrf.mxu0
        %909 = vdwg.mxu0
        %v910 = vmul.f32 %v907, 0.35355338
        %v911 = vsel %vm644, -1e+09, %v910
        %v912 = vsel %vm645, %v911, -inf
        %913 = vmax.xlane.f32.xlu0 %v912
        %v914 = vpop.xlane.xlu0 %913
        %v915 = vsub.f32 %v911, %v914
        %v916 = vmul.f32 %v915, 1.442695
        %v917 = vpow.pop %v916
        %v918 = vsel %vm645, %v917, 0.0
        %919 = vadd.xlane.f32.xlu0 %v918
        %v920 = vpop.xlane.xlu0 %919
        %v921 = vrcp.pop %v920
        %v922 = vmul.f32 %v917, %v921
        %v923 = vpack.c.bf16 %v922, %v922
        %924 = vrot.lane.b32.xlu0 %v681, 72
        %v925 = vpop.permute.xlu0 %924
        %v927 = vsel %vm645, %v923, 0
        %v930 = vsel %vm687, %v925, 0
        %932 = vmatpush.bf16.msra.mxu0 0
        %933 = vmatpush.bf16.msra.mxu0 0
        %934 = vmatpush.bf16.msra.mxu0 0
        %935 = vmatpush.bf16.msra.mxu0 0
        %936 = vmatpush.bf16.msra.mxu0 0
        %937 = vmatpush.bf16.msra.mxu0 0
        %938 = vmatpush.bf16.msra.mxu0 0
        %939 = vmatpush.bf16.msra.mxu0 %v930
        %940 = vmatmul.bf16.gmra.mxu0 %v927
        %v941 = vpop.f32.mrf.mxu0
        %v942 = vadd.f32 0.0, %v941
        %v943 = vpop.f32.mrf.mxu0
        %944 = vdwg.mxu0
        %v945 = vpack.c.bf16 %v942, %v942
        %v946 = vld [vmem:[%s7 + $0xc] sm:$0xf]
        %v948 = vsel %vm645, %v945, 0
        %v951 = vsel %vm687, %v946, 0
        %953 = vmatpush.bf16.msra.mxu0 0
        %954 = vmatpush.bf16.msra.mxu0 0
        %955 = vmatpush.bf16.msra.mxu0 0
        %956 = vmatpush.bf16.msra.mxu0 0
        %957 = vmatpush.bf16.msra.mxu0 0
        %958 = vmatpush.bf16.msra.mxu0 0
        %959 = vmatpush.bf16.msra.mxu0 0
        %960 = vmatpush.bf16.msra.mxu0 %v951
        %961 = vmatmul.bf16.gmra.mxu0 %v948
        %v962 = vpop.f32.mrf.mxu0
        %v963 = vadd.f32 0.0, %v962
        %v964 = vpop.f32.mrf.mxu0
        %965 = vdwg.mxu0
        %v966 = vadd.f32 %v886, %v963
        %v967 = vld [vmem:[%s8] sm:$0x1]
        %v969 = vperm.slane %v967, 0
        %v971 = vadd.f32 %v966, %v969
        %v972 = vadd.f32 %v561, %v971
        %v973 = vsel %vm588, %v972, 0.0
        %974 = vadd.xlane.f32.xlu0 %v973
        %v975 = vpop.xlane.xlu0 %974
        %v976 = vrcp.pop 32.0
        %v977 = vmul.f32 32.0, %v976
        %v978 = vsub.f32 1.0, %v977
        %v979 = vmul.f32 %v976, %v978
        %v980 = vadd.f32 %v976, %v979
        %vm981 = vweird.f32 %v976
        %v982 = vsel %vm981, %v976, %v980
        %v983 = vmul.f32 %v975, %v982
        %v984 = vsub.f32 %v972, %v983
        %v985 = vmul.f32 %v984, %v984
        %v986 = vsel %vm588, %v985, 0.0
        %987 = vadd.xlane.f32.xlu0 %v986
        %v988 = vpop.xlane.xlu0 %987
        %v989 = vmul.f32 %v988, %v982
        %v990 = vadd.f32 %v989, 1e-05
        %v991 = vrsqrt.pop %v990
        %v992 = vmul.f32 %v991, %v990
        %v993 = vmul.f32 %v992, %v991
        %v994 = vmul.f32 0.5, %v993
        %v995 = vsub.f32 1.5, %v994
        %v996 = vmul.f32 %v991, %v995
        %vm997 = vweird.f32 %v990
        %vm998 = vweird.f32 %v991
        %vm999 = vmor %vm997, %vm998
        %v1000 = vsel %vm999, %v991, %v996
        %v1001 = vmul.f32 %v984, %v1000
        %v1003 = vperm.slane %v564, 0
        %v1005 = vmul.f32 %v1001, %v1003
        %v1007 = vperm.slane %v565, 0
        %v1009 = vadd.f32 %v1005, %v1007
        %v1010 = vpack.c.bf16 %v1009, %v1009
        loop: start=0, step=1, limit=4
        $region81: #{tpu_custom_call.1} parent=79 // loop_pre_header
          _
        $region82: #{tpu_custom_call.1} parent=79 // loop_header
          %s1012 = sphi 0, %s1016
          %p1013 = scmp.ge.s32.totalorder %s1012, 4
          %v1017 = vphi 0.0, %v1457
        $region83: #{tpu_custom_call.1} parent=79 // loop_header_branch
          %1015 = sbr.rel (%p1013) target = $region87
        $region84: #{tpu_custom_call.1} parent=79 // loop_body
          %s1018 = smul.u32 %s1012, 512
          %s1019 = sshra.s32 %s1018, 7
          %s1020 = sand.u32 %s1018, 127
          %s1021 = smul.addr %s1019, 4
          %s1022 = scalar_lea.vmem %s9, %s1021
          %v1023 = vld [vmem:[%s1022] sm:$0xff]
          %v1024 = vld [vmem:[%s1022 + $0x8] sm:$0xff]
          %v1025 = vld [vmem:[%s1022 + $0x40] sm:$0xff]
          %v1026 = vld [vmem:[%s1022 + $0x48] sm:$0xff]
          %v1027 = vld [vmem:[%s1022 + $0x80] sm:$0xff]
          %v1028 = vld [vmem:[%s1022 + $0x88] sm:$0xff]
          %v1029 = vld [vmem:[%s1022 + $0xc0] sm:$0xff]
          %v1030 = vld [vmem:[%s1022 + $0xc8] sm:$0xff]
          %s1031 = scalar_lea.vmem %s10, %s1019
          %v1032 = vld [vmem:[%s1031] sm:$0xf]
          %v1034 = vperm.slane %v1032, 0
          %v1035 = vperm.slane %v1032, 1
          %v1036 = vperm.slane %v1032, 2
          %v1037 = vperm.slane %v1032, 3
          %v1050 = vunpack.c.l.b16 %v1023
          %v1051 = vunpack.c.h.b16 %v1023
          %v1052 = vunpack.c.l.b16 %v1024
          %v1053 = vunpack.c.h.b16 %v1024
          %v1054 = vunpack.c.l.b16 %v1025
          %v1055 = vunpack.c.h.b16 %v1025
          %v1056 = vunpack.c.l.b16 %v1026
          %v1057 = vunpack.c.h.b16 %v1026
          %v1058 = vunpack.c.l.b16 %v1027
          %v1059 = vunpack.c.h.b16 %v1027
          %v1060 = vunpack.c.l.b16 %v1028
          %v1061 = vunpack.c.h.b16 %v1028
          %v1062 = vunpack.c.l.b16 %v1029
          %v1063 = vunpack.c.h.b16 %v1029
          %v1064 = vunpack.c.l.b16 %v1030
          %v1065 = vunpack.c.h.b16 %v1030
          %v1066 = vpack.c.b16 %v1054, %v1050
          %v1067 = vpack.c.b16 %v1055, %v1051
          %v1068 = vpack.c.b16 %v1056, %v1052
          %v1069 = vpack.c.b16 %v1057, %v1053
          %v1070 = vpack.c.b16 %v1062, %v1058
          %v1071 = vpack.c.b16 %v1063, %v1059
          %v1072 = vpack.c.b16 %v1064, %v1060
          %v1073 = vpack.c.b16 %v1065, %v1061
          %v1083 = vsel %vm588, %v1010, 0
          %1085 = vmatpush.bf16.msra.mxu0 0
          %1086 = vmatpush.bf16.msra.mxu0 0
          %1087 = vmatpush.bf16.msra.mxu0 0
          %1088 = vmatpush.bf16.msra.mxu0 0
          %1089 = vmatpush.bf16.msra.mxu0 0
          %1090 = vmatpush.bf16.msra.mxu0 0
          %1091 = vmatpush.bf16.msra.mxu0 %v1070
          %1092 = vmatpush.bf16.msra.mxu0 %v1066
          %1093 = vmatmul.bf16.gmra.mxu0 %v1083
          %v1094 = vpop.f32.mrf.mxu0
          %v1095 = vadd.f32 %v1034, %v1094
          %v1096 = vpop.f32.mrf.mxu0
          %1097 = vdwg.mxu0
          %1098 = vmatpush.bf16.msra.mxu0 0
          %1099 = vmatpush.bf16.msra.mxu0 0
          %1100 = vmatpush.bf16.msra.mxu0 0
          %1101 = vmatpush.bf16.msra.mxu0 0
          %1102 = vmatpush.bf16.msra.mxu0 0
          %1103 = vmatpush.bf16.msra.mxu0 0
          %1104 = vmatpush.bf16.msra.mxu0 %v1071
          %1105 = vmatpush.bf16.msra.mxu0 %v1067
          %1106 = vmatmul.bf16.gmra.mxu0 %v1083
          %v1107 = vpop.f32.mrf.mxu0
          %v1108 = vadd.f32 %v1035, %v1107
          %v1109 = vpop.f32.mrf.mxu0
          %1110 = vdwg.mxu0
          %1111 = vmatpush.bf16.msra.mxu0 0
          %1112 = vmatpush.bf16.msra.mxu0 0
          %1113 = vmatpush.bf16.msra.mxu0 0
          %1114 = vmatpush.bf16.msra.mxu0 0
          %1115 = vmatpush.bf16.msra.mxu0 0
          %1116 = vmatpush.bf16.msra.mxu0 0
          %1117 = vmatpush.bf16.msra.mxu0 %v1072
          %1118 = vmatpush.bf16.msra.mxu0 %v1068
          %1119 = vmatmul.bf16.gmra.mxu0 %v1083
          %v1120 = vpop.f32.mrf.mxu0
          %v1121 = vadd.f32 %v1036, %v1120
          %v1122 = vpop.f32.mrf.mxu0
          %1123 = vdwg.mxu0
          %1124 = vmatpush.bf16.msra.mxu0 0
          %1125 = vmatpush.bf16.msra.mxu0 0
          %1126 = vmatpush.bf16.msra.mxu0 0
          %1127 = vmatpush.bf16.msra.mxu0 0
          %1128 = vmatpush.bf16.msra.mxu0 0
          %1129 = vmatpush.bf16.msra.mxu0 0
          %1130 = vmatpush.bf16.msra.mxu0 %v1073
          %1131 = vmatpush.bf16.msra.mxu0 %v1069
          %1132 = vmatmul.bf16.gmra.mxu0 %v1083
          %v1133 = vpop.f32.mrf.mxu0
          %v1134 = vadd.f32 %v1037, %v1133
          %v1135 = vpop.f32.mrf.mxu0
          %1136 = vdwg.mxu0
          %v1137 = vmax.f32 %v1095, 0.0
          %v1138 = vmax.f32 %v1108, 0.0
          %v1139 = vmax.f32 %v1121, 0.0
          %v1140 = vmax.f32 %v1134, 0.0
          %v1141 = vpack.c.bf16 %v1137, %v1137
          %v1142 = vpack.c.bf16 %v1138, %v1138
          %v1143 = vpack.c.bf16 %v1139, %v1139
          %v1144 = vpack.c.bf16 %v1140, %v1140
          %s1145 = sshra.s32 %s1018, 3
          %s1146 = sand.u32 %s1018, 7
          %s1147 = smul.addr %s1145, 4
          %s1148 = scalar_lea.vmem %s11, %s1147
          %v1149 = vld [vmem:[%s1148] sm:$0xf]
          %v1150 = vld [vmem:[%s1148 + $0x4] sm:$0xf]
          %v1151 = vld [vmem:[%s1148 + $0x8] sm:$0xf]
          %v1152 = vld [vmem:[%s1148 + $0xc] sm:$0xf]
          %v1153 = vld [vmem:[%s1148 + $0x10] sm:$0xf]
          %v1154 = vld [vmem:[%s1148 + $0x14] sm:$0xf]
          %v1155 = vld [vmem:[%s1148 + $0x18] sm:$0xf]
          %v1156 = vld [vmem:[%s1148 + $0x1c] sm:$0xf]
          %v1157 = vld [vmem:[%s1148 + $0x20] sm:$0xf]
          %v1158 = vld [vmem:[%s1148 + $0x24] sm:$0xf]
          %v1159 = vld [vmem:[%s1148 + $0x28] sm:$0xf]
          %v1160 = vld [vmem:[%s1148 + $0x2c] sm:$0xf]
          %v1161 = vld [vmem:[%s1148 + $0x30] sm:$0xf]
          %v1162 = vld [vmem:[%s1148 + $0x34] sm:$0xf]
          %v1163 = vld [vmem:[%s1148 + $0x38] sm:$0xf]
          %v1164 = vld [vmem:[%s1148 + $0x3c] sm:$0xf]
          %v1165 = vld [vmem:[%s1148 + $0x40] sm:$0xf]
          %v1166 = vld [vmem:[%s1148 + $0x44] sm:$0xf]
          %v1167 = vld [vmem:[%s1148 + $0x48] sm:$0xf]
          %v1168 = vld [vmem:[%s1148 + $0x4c] sm:$0xf]
          %v1169 = vld [vmem:[%s1148 + $0x50] sm:$0xf]
          %v1170 = vld [vmem:[%s1148 + $0x54] sm:$0xf]
          %v1171 = vld [vmem:[%s1148 + $0x58] sm:$0xf]
          %v1172 = vld [vmem:[%s1148 + $0x5c] sm:$0xf]
          %v1173 = vld [vmem:[%s1148 + $0x60] sm:$0xf]
          %v1174 = vld [vmem:[%s1148 + $0x64] sm:$0xf]
          %v1175 = vld [vmem:[%s1148 + $0x68] sm:$0xf]
          %v1176 = vld [vmem:[%s1148 + $0x6c] sm:$0xf]
          %v1177 = vld [vmem:[%s1148 + $0x70] sm:$0xf]
          %v1178 = vld [vmem:[%s1148 + $0x74] sm:$0xf]
          %v1179 = vld [vmem:[%s1148 + $0x78] sm:$0xf]
          %v1180 = vld [vmem:[%s1148 + $0x7c] sm:$0xf]
          %v1181 = vld [vmem:[%s1148 + $0x80] sm:$0xf]
          %v1182 = vld [vmem:[%s1148 + $0x84] sm:$0xf]
          %v1183 = vld [vmem:[%s1148 + $0x88] sm:$0xf]
          %v1184 = vld [vmem:[%s1148 + $0x8c] sm:$0xf]
          %v1185 = vld [vmem:[%s1148 + $0x90] sm:$0xf]
          %v1186 = vld [vmem:[%s1148 + $0x94] sm:$0xf]
          %v1187 = vld [vmem:[%s1148 + $0x98] sm:$0xf]
          %v1188 = vld [vmem:[%s1148 + $0x9c] sm:$0xf]
          %v1189 = vld [vmem:[%s1148 + $0xa0] sm:$0xf]
          %v1190 = vld [vmem:[%s1148 + $0xa4] sm:$0xf]
          %v1191 = vld [vmem:[%s1148 + $0xa8] sm:$0xf]
          %v1192 = vld [vmem:[%s1148 + $0xac] sm:$0xf]
          %v1193 = vld [vmem:[%s1148 + $0xb0] sm:$0xf]
          %v1194 = vld [vmem:[%s1148 + $0xb4] sm:$0xf]
          %v1195 = vld [vmem:[%s1148 + $0xb8] sm:$0xf]
          %v1196 = vld [vmem:[%s1148 + $0xbc] sm:$0xf]
          %v1197 = vld [vmem:[%s1148 + $0xc0] sm:$0xf]
          %v1198 = vld [vmem:[%s1148 + $0xc4] sm:$0xf]
          %v1199 = vld [vmem:[%s1148 + $0xc8] sm:$0xf]
          %v1200 = vld [vmem:[%s1148 + $0xcc] sm:$0xf]
          %v1201 = vld [vmem:[%s1148 + $0xd0] sm:$0xf]
          %v1202 = vld [vmem:[%s1148 + $0xd4] sm:$0xf]
          %v1203 = vld [vmem:[%s1148 + $0xd8] sm:$0xf]
          %v1204 = vld [vmem:[%s1148 + $0xdc] sm:$0xf]
          %v1205 = vld [vmem:[%s1148 + $0xe0] sm:$0xf]
          %v1206 = vld [vmem:[%s1148 + $0xe4] sm:$0xf]
          %v1207 = vld [vmem:[%s1148 + $0xe8] sm:$0xf]
          %v1208 = vld [vmem:[%s1148 + $0xec] sm:$0xf]
          %v1209 = vld [vmem:[%s1148 + $0xf0] sm:$0xf]
          %v1210 = vld [vmem:[%s1148 + $0xf4] sm:$0xf]
          %v1211 = vld [vmem:[%s1148 + $0xf8] sm:$0xf]
          %v1212 = vld [vmem:[%s1148 + $0xfc] sm:$0xf]
          %v1277 = vunpack.c.l.b16 %v1149
          %v1278 = vunpack.c.l.b16 %v1150
          %v1279 = vunpack.c.l.b16 %v1151
          %v1280 = vunpack.c.l.b16 %v1152
          %v1281 = vunpack.c.l.b16 %v1153
          %v1282 = vunpack.c.l.b16 %v1154
          %v1283 = vunpack.c.l.b16 %v1155
          %v1284 = vunpack.c.l.b16 %v1156
          %v1285 = vunpack.c.l.b16 %v1157
          %v1286 = vunpack.c.l.b16 %v1158
          %v1287 = vunpack.c.l.b16 %v1159
          %v1288 = vunpack.c.l.b16 %v1160
          %v1289 = vunpack.c.l.b16 %v1161
          %v1290 = vunpack.c.l.b16 %v1162
          %v1291 = vunpack.c.l.b16 %v1163
          %v1292 = vunpack.c.l.b16 %v1164
          %v1293 = vunpack.c.l.b16 %v1165
          %v1294 = vunpack.c.l.b16 %v1166
          %v1295 = vunpack.c.l.b16 %v1167
          %v1296 = vunpack.c.l.b16 %v1168
          %v1297 = vunpack.c.l.b16 %v1169
          %v1298 = vunpack.c.l.b16 %v1170
          %v1299 = vunpack.c.l.b16 %v1171
          %v1300 = vunpack.c.l.b16 %v1172
          %v1301 = vunpack.c.l.b16 %v1173
          %v1302 = vunpack.c.l.b16 %v1174
          %v1303 = vunpack.c.l.b16 %v1175
          %v1304 = vunpack.c.l.b16 %v1176
          %v1305 = vunpack.c.l.b16 %v1177
          %v1306 = vunpack.c.l.b16 %v1178
          %v1307 = vunpack.c.l.b16 %v1179
          %v1308 = vunpack.c.l.b16 %v1180
          %v1309 = vunpack.c.l.b16 %v1181
          %v1310 = vunpack.c.l.b16 %v1182
          %v1311 = vunpack.c.l.b16 %v1183
          %v1312 = vunpack.c.l.b16 %v1184
          %v1313 = vunpack.c.l.b16 %v1185
          %v1314 = vunpack.c.l.b16 %v1186
          %v1315 = vunpack.c.l.b16 %v1187
          %v1316 = vunpack.c.l.b16 %v1188
          %v1317 = vunpack.c.l.b16 %v1189
          %v1318 = vunpack.c.l.b16 %v1190
          %v1319 = vunpack.c.l.b16 %v1191
          %v1320 = vunpack.c.l.b16 %v1192
          %v1321 = vunpack.c.l.b16 %v1193
          %v1322 = vunpack.c.l.b16 %v1194
          %v1323 = vunpack.c.l.b16 %v1195
          %v1324 = vunpack.c.l.b16 %v1196
          %v1325 = vunpack.c.l.b16 %v1197
          %v1326 = vunpack.c.l.b16 %v1198
          %v1327 = vunpack.c.l.b16 %v1199
          %v1328 = vunpack.c.l.b16 %v1200
          %v1329 = vunpack.c.l.b16 %v1201
          %v1330 = vunpack.c.l.b16 %v1202
          %v1331 = vunpack.c.l.b16 %v1203
          %v1332 = vunpack.c.l.b16 %v1204
          %v1333 = vunpack.c.l.b16 %v1205
          %v1334 = vunpack.c.l.b16 %v1206
          %v1335 = vunpack.c.l.b16 %v1207
          %v1336 = vunpack.c.l.b16 %v1208
          %v1337 = vunpack.c.l.b16 %v1209
          %v1338 = vunpack.c.l.b16 %v1210
          %v1339 = vunpack.c.l.b16 %v1211
          %v1340 = vunpack.c.l.b16 %v1212
          %v1341 = vpack.c.b16 %v1278, %v1277
          %v1342 = vpack.c.b16 %v1280, %v1279
          %v1343 = vpack.c.b16 %v1282, %v1281
          %v1344 = vpack.c.b16 %v1284, %v1283
          %v1345 = vpack.c.b16 %v1286, %v1285
          %v1346 = vpack.c.b16 %v1288, %v1287
          %v1347 = vpack.c.b16 %v1290, %v1289
          %v1348 = vpack.c.b16 %v1292, %v1291
          %v1349 = vpack.c.b16 %v1294, %v1293
          %v1350 = vpack.c.b16 %v1296, %v1295
          %v1351 = vpack.c.b16 %v1298, %v1297
          %v1352 = vpack.c.b16 %v1300, %v1299
          %v1353 = vpack.c.b16 %v1302, %v1301
          %v1354 = vpack.c.b16 %v1304, %v1303
          %v1355 = vpack.c.b16 %v1306, %v1305
          %v1356 = vpack.c.b16 %v1308, %v1307
          %v1357 = vpack.c.b16 %v1310, %v1309
          %v1358 = vpack.c.b16 %v1312, %v1311
          %v1359 = vpack.c.b16 %v1314, %v1313
          %v1360 = vpack.c.b16 %v1316, %v1315
          %v1361 = vpack.c.b16 %v1318, %v1317
          %v1362 = vpack.c.b16 %v1320, %v1319
          %v1363 = vpack.c.b16 %v1322, %v1321
          %v1364 = vpack.c.b16 %v1324, %v1323
          %v1365 = vpack.c.b16 %v1326, %v1325
          %v1366 = vpack.c.b16 %v1328, %v1327
          %v1367 = vpack.c.b16 %v1330, %v1329
          %v1368 = vpack.c.b16 %v1332, %v1331
          %v1369 = vpack.c.b16 %v1334, %v1333
          %v1370 = vpack.c.b16 %v1336, %v1335
          %v1371 = vpack.c.b16 %v1338, %v1337
          %v1372 = vpack.c.b16 %v1340, %v1339
          %1405 = vmatpush.bf16.msra.mxu0 %v1348
          %1406 = vmatpush.bf16.msra.mxu0 %v1347
          %1407 = vmatpush.bf16.msra.mxu0 %v1346
          %1408 = vmatpush.bf16.msra.mxu0 %v1345
          %1409 = vmatpush.bf16.msra.mxu0 %v1344
          %1410 = vmatpush.bf16.msra.mxu0 %v1343
          %1411 = vmatpush.bf16.msra.mxu0 %v1342
          %1412 = vmatpush.bf16.msra.mxu0 %v1341
          %1413 = vmatmul.bf16.gmra.mxu0 %v1141
          %v1414 = vpop.f32.mrf.mxu0
          %v1415 = vadd.f32 0.0, %v1414
          %v1416 = vpop.f32.mrf.mxu0
          %1417 = vdwg.mxu0
          %1418 = vmatpush.bf16.msra.mxu0 %v1356
          %1419 = vmatpush.bf16.msra.mxu0 %v1355
          %1420 = vmatpush.bf16.msra.mxu0 %v1354
          %1421 = vmatpush.bf16.msra.mxu0 %v1353
          %1422 = vmatpush.bf16.msra.mxu0 %v1352
          %1423 = vmatpush.bf16.msra.mxu0 %v1351
          %1424 = vmatpush.bf16.msra.mxu0 %v1350
          %1425 = vmatpush.bf16.msra.mxu0 %v1349
          %1426 = vmatmul.bf16.gmra.mxu0 %v1142
          %v1427 = vpop.f32.mrf.mxu0
          %v1428 = vadd.f32 %v1415, %v1427
          %v1429 = vpop.f32.mrf.mxu0
          %1430 = vdwg.mxu0
          %1431 = vmatpush.bf16.msra.mxu0 %v1364
          %1432 = vmatpush.bf16.msra.mxu0 %v1363
          %1433 = vmatpush.bf16.msra.mxu0 %v1362
          %1434 = vmatpush.bf16.msra.mxu0 %v1361
          %1435 = vmatpush.bf16.msra.mxu0 %v1360
          %1436 = vmatpush.bf16.msra.mxu0 %v1359
          %1437 = vmatpush.bf16.msra.mxu0 %v1358
          %1438 = vmatpush.bf16.msra.mxu0 %v1357
          %1439 = vmatmul.bf16.gmra.mxu0 %v1143
          %v1440 = vpop.f32.mrf.mxu0
          %v1441 = vadd.f32 %v1428, %v1440
          %v1442 = vpop.f32.mrf.mxu0
          %1443 = vdwg.mxu0
          %1444 = vmatpush.bf16.msra.mxu0 %v1372
          %1445 = vmatpush.bf16.msra.mxu0 %v1371
          %1446 = vmatpush.bf16.msra.mxu0 %v1370
          %1447 = vmatpush.bf16.msra.mxu0 %v1369
          %1448 = vmatpush.bf16.msra.mxu0 %v1368
          %1449 = vmatpush.bf16.msra.mxu0 %v1367
          %1450 = vmatpush.bf16.msra.mxu0 %v1366
          %1451 = vmatpush.bf16.msra.mxu0 %v1365
          %1452 = vmatmul.bf16.gmra.mxu0 %v1144
          %v1453 = vpop.f32.mrf.mxu0
          %v1454 = vadd.f32 %v1441, %v1453
          %v1455 = vpop.f32.mrf.mxu0
          %1456 = vdwg.mxu0
          %v1457 = vadd.f32 %v1017, %v1454
        $region85: #{tpu_custom_call.1} parent=79 // loop_footer
          %s1016 = sadd.s32 1, %s1012
        $region86: #{tpu_custom_call.1} parent=79 // loop_footer_branch
          %1011 = sbr.rel target = $region82
        $region87: #{tpu_custom_call.1} parent=79 // loop_exit
          _
        %v1458 = vld [vmem:[%s12] sm:$0x1]
        %v1460 = vperm.slane %v1458, 0
        %v1462 = vadd.f32 %v1017, %v1460
        %v1463 = vadd.f32 %v1009, %v1462
        %v1464 = vsel %vm588, %v1463, 0.0
        %1465 = vadd.xlane.f32.xlu0 %v1464
        %v1466 = vpop.xlane.xlu0 %1465
        %v1467 = vmul.f32 %v1466, %v982
        %v1468 = vsub.f32 %v1463, %v1467
        %v1469 = vmul.f32 %v1468, %v1468
        %v1470 = vsel %vm588, %v1469, 0.0
        %1471 = vadd.xlane.f32.xlu0 %v1470
        %v1472 = vpop.xlane.xlu0 %1471
        %v1473 = vmul.f32 %v1472, %v982
        %v1474 = vadd.f32 %v1473, 1e-05
        %v1475 = vrsqrt.pop %v1474
        %v1476 = vmul.f32 %v1475, %v1474
        %v1477 = vmul.f32 %v1476, %v1475
        %v1478 = vmul.f32 0.5, %v1477
        %v1479 = vsub.f32 1.5, %v1478
        %v1480 = vmul.f32 %v1475, %v1479
        %vm1481 = vweird.f32 %v1474
        %vm1482 = vweird.f32 %v1475
        %vm1483 = vmor %vm1481, %vm1482
        %v1484 = vsel %vm1483, %v1475, %v1480
        %v1485 = vmul.f32 %v1468, %v1484
        %v1486 = vmul.f32 %v1485, %v1003
        %v1487 = vadd.f32 %v1486, %v1007
        %1488 = vst.msk [vmem:[%s541] sm:$0xff] %vm588, %v1487
        %s1489 = sand.u32 %s385, 1
        %s1490 = scalar_lea.sflag [#allocation3], %s1489
        %s1491 = sand.u32 %s385, 1
        %s1492 = smul.addr %s1491, 8
        %s1493 = scalar_lea.vmem [#allocation2], %s1492
        // Predicated region
        $region88: #{tpu_custom_call.1} parent=79 // pred_check
          %p1494 = pneg %p395
        $region89: #{tpu_custom_call.1} parent=79 // pred_check_branch
          %1496 = sbr.rel (%p1494) target = $region91
        $region90: #{tpu_custom_call.1} parent=79 // pred_region
          %1498 = vsyncadd %s1490, 0
          %s1499 = sadd.s32 %s34, %s33
          %s1500 = smul.addr %s1499, 8
          %s1501 = scalar_lea.hbm %s15, %s1500
          %s1503 = sshll.u32 %s1493, 4
          %s1504 = int_to_ptr.vmem [resolvable:$true] %s1503
          %s1505 = sshll.u32 %s1501, 4
          %s1506 = int_to_ptr.hbm [resolvable:$true] %s1505
          %1508 = dma.vmem_to_hbm [thread:$0]  %s1504, 128, %s1506, %s1490
        $region91: #{tpu_custom_call.1} parent=79 // pred_fallthru
          _
      $region80: #{tpu_custom_call.1} parent=5 // pred_fallthru
        _
      %p1509 = scmp.le.s32.totalorder 2, %s24
      // Predicated region
      $region92: #{tpu_custom_call.1} parent=5 // pred_check
        %p1510 = pneg %p1509
      $region93: #{tpu_custom_call.1} parent=5 // pred_check_branch
        %1512 = sbr.rel (%p1510) target = $region95
      $region94: #{tpu_custom_call.1} parent=5 // pred_region
        %s1513 = ssub.s32 %s24, 2
        // Predicated region
        $region96: #{tpu_custom_call.1} parent=94 // pred_check
          %p1514 = pneg %p401
        $region97: #{tpu_custom_call.1} parent=94 // pred_check_branch
          %1516 = sbr.rel (%p1514) target = $region99
        $region98: #{tpu_custom_call.1} parent=94 // pred_region
          %s1517 = sand.u32 %s386, 1
          %s1518 = scalar_lea.sflag [#allocation3], %s1517
          %s1519 = sand.u32 %s386, 1
          %s1520 = smul.addr %s1519, 8
          %s1521 = scalar_lea.vmem [#allocation2], %s1520
          %1523 = dma.done %s1518, 128
        $region99: #{tpu_custom_call.1} parent=94 // pred_fallthru
          _
      $region95: #{tpu_custom_call.1} parent=5 // pred_fallthru
        _
    $region6: #{tpu_custom_call.1} parent=1 // loop_footer
      %s28 = sadd.s32 1, %s24
    $region7: #{tpu_custom_call.1} parent=1 // loop_footer_branch
      %23 = sbr.rel target = $region3
    $region8: #{tpu_custom_call.1} parent=1 // loop_exit
      _
    %1524 = vsyncpa [#allocation3], 1
    %s1525 = scalar_lea.sflag [#allocation3], 1
    %1526 = vsyncpa %s1525, 1

</llo_original>
